<compile_context>
chip_gen: v7x
topology: tpu7x:2x2x1
jax: 0.10.0
libtpu: 0.0.40
codegen_flags: <defaults>
</compile_context>

<pallas_src>
import functools

import jax
import jax.numpy as jnp
from jax import lax
from jax.experimental import pallas as pl
from jax.experimental.pallas import tpu as pltpu

EPS = 1e-5
MM_DTYPE = jnp.bfloat16          # MXU / streaming dtype (accumulate in f32)
VMEM_LIMIT = 48 * 1024 * 1024    # <= v7x ceiling per review; plenty for tiles


# ------------------------------ tiling helpers -------------------------------

def _round_up(x, m):
    return (x + m - 1) // m * m


def _choose_m_tiling(M):
    """Row (M) tile + padded M.  Prefer big tiles (fewer ~0.35us grid steps)."""
    for t in (1024, 512, 256, 128):
        if M % t == 0:
            return t, M
    if M < 1024:
        mp = _round_up(M, 8)
        return mp, mp                       # single full-M block
    return 512, _round_up(M, 512)


def _choose_reduce_tile(K):
    """K-axis tile: big 128-aligned tiles when K is large & divisible, else a
    single full-K step (full-dim block => no padding for small channel counts)."""
    if K % 1024 == 0 and K > 1024:
        return 1024
    if K % 512 == 0 and K > 512:
        return 512
    if K % 256 == 0 and K > 512:
        return 256
    return K


def _choose_lane_tile(C):
    for t in (512, 256, 128):
        if C % t == 0:
            return t
    return C                                 # full-dim block (no padding)


def _choose_row_tile(R):
    for t in (1024, 512, 256, 128, 64, 32, 16, 8):
        if R % t == 0:
            return t
    return R


# -------------------- Pallas kernel: matmul + BN partial stats ---------------

def _matmul_stats_kernel(a_ref, w_ref, y_ref, ssum_ref, ssq_ref, acc_ref):
    @pl.when(pl.program_id(2) == 0)
    def _init():
        acc_ref[...] = jnp.zeros_like(acc_ref)

    acc_ref[...] += jnp.dot(a_ref[...], w_ref[...],
                            preferred_element_type=jnp.float32)

    @pl.when(pl.program_id(2) == pl.num_programs(2) - 1)
    def _finalize():
        acc = acc_ref[...]
        y_ref[...] = acc.astype(y_ref.dtype)          # bf16 store (review #2)
        # Per-(M-tile, C-tile) partial BN statistics from the f32 accumulator.
        ssum_ref[...] = jnp.sum(acc, axis=0, keepdims=True)[None]
        ssq_ref[...] = jnp.sum(acc * acc, axis=0, keepdims=True)[None]


def matmul_stats(a, w):
    """Conv-as-matmul a:(M,K) @ w:(K,C), bf16 MXU inputs, f32 accumulation.

    Returns (y, ssum, ssq):
      y    : (Mp, C) bf16,
      ssum : (n_mt, 1, C) f32 partial per-channel sums,
      ssq  : (n_mt, 1, C) f32 partial per-channel sums of squares.
    No conv bias (no-op under the training-mode BatchNorm that follows).
    """
    M, K = a.shape
    Kw, C = w.shape
    assert K == Kw
    a = a.astype(MM_DTYPE)
    w = w.astype(MM_DTYPE)

    tm, Mp = _choose_m_tiling(M)
    tk = _choose_reduce_tile(K)
    tn = _choose_lane_tile(C)
    if Mp != M:                               # small zero-row pad only if needed
        a = jnp.pad(a, ((0, Mp - M), (0, 0)))
    n_mt = Mp // tm
    grid = (n_mt, C // tn, K // tk)

    y, ssum, ssq = pl.pallas_call(
        _matmul_stats_kernel,
        out_shape=(
            jax.ShapeDtypeStruct((Mp, C), MM_DTYPE),
            jax.ShapeDtypeStruct((n_mt, 1, C), jnp.float32),
            jax.ShapeDtypeStruct((n_mt, 1, C), jnp.float32),
        ),
        grid=grid,
        in_specs=[
            pl.BlockSpec((tm, tk), lambda i, j, k: (i, k)),
            pl.BlockSpec((tk, tn), lambda i, j, k: (k, j)),
        ],
        out_specs=(
            pl.BlockSpec((tm, tn), lambda i, j, k: (i, j)),
            pl.BlockSpec((1, 1, tn), lambda i, j, k: (i, 0, j)),
            pl.BlockSpec((1, 1, tn), lambda i, j, k: (i, 0, j)),
        ),
        scratch_shapes=[pltpu.VMEM((tm, tn), jnp.float32)],
        compiler_params=pltpu.CompilerParams(
            dimension_semantics=("parallel", "parallel", "arbitrary"),
            vmem_limit_bytes=VMEM_LIMIT),
    )(a, w)
    return y, ssum, ssq


# ---------------- tiny JAX pre-reduction: stats -> per-channel affine --------

def _bn_scale_shift(ssum, ssq, gamma, beta, m_real):
    """Reduce the per-M-tile partial stats ONCE into BN(x) = x*scale + shift."""
    inv_m = 1.0 / float(m_real)
    mean = jnp.sum(ssum, axis=(0, 1)) * inv_m          # (C,)
    ex2 = jnp.sum(ssq, axis=(0, 1)) * inv_m
    # Single-pass variance (E[x^2]-mean^2), f32, clamped.  TODO(synk): switch to
    # centered / Welford accumulation if |mean| >> std at production scale.
    var = jnp.maximum(ex2 - mean * mean, 0.0)
    scale = gamma.astype(jnp.float32) * lax.rsqrt(var + EPS)
    shift = beta.astype(jnp.float32) - mean * scale
    return scale, shift


# ---------------- Pallas kernel: fused BN FMA (+ReLU / +residual) ------------

def bn_apply(y, scale, shift, *, relu=False, res=None, res_scale=None,
             res_shift=None, out_dtype=jnp.float32):
    """out = [relu](y*scale + shift) [+ (res*res_scale + res_shift) | + res]

    y / res are (Mp, C) bf16; scale/shift are per-channel f32.  One lane-dense
    elementwise pass over HBM."""
    Mp, C = y.shape
    has_res = res is not None
    res_affine = res_scale is not None

    def cvec(v):
        return v.astype(jnp.float32).reshape(1, C)

    scale, shift = cvec(scale), cvec(shift)
    if res_affine:
        res_scale, res_shift = cvec(res_scale), cvec(res_shift)

    # Lane-pack narrow channel dims: (Mp, C) -> (Mp*C/width, width) is a free
    # bitcast reshape of the row-major buffer; the per-channel vectors tile.
    rows, width, rep = Mp, C, 1
    if C < 128 and 128 % C == 0 and (Mp * C) % 128 == 0:
        width = 128
        for w_cand in (512, 256):
            if (Mp * C) % w_cand == 0 and (Mp * C) // w_cand >= 8:
                width = w_cand
                break
        rep = width // C
        rows = (Mp * C) // width

    def pack(m):
        return m.reshape(rows, width) if rep > 1 else m

    def tile_vec(v):
        return jnp.tile(v, (1, rep)) if rep > 1 else v

    y = pack(y)
    scale, shift = tile_vec(scale), tile_vec(shift)
    if has_res:
        res = pack(res)
        if res_affine:
            res_scale, res_shift = tile_vec(res_scale), tile_vec(res_shift)

    tr, tc = _choose_row_tile(rows), _choose_lane_tile(width)
    grid = (rows // tr, width // tc)

    def kernel(*refs):
        if has_res and res_affine:
            y_ref, s_ref, b_ref, r_ref, rs_ref, rb_ref, o_ref = refs
        elif has_res:
            y_ref, s_ref, b_ref, r_ref, o_ref = refs
        else:
            y_ref, s_ref, b_ref, o_ref = refs
        out = y_ref[...].astype(jnp.float32) * s_ref[...] + b_ref[...]
        if relu:
            out = jnp.maximum(out, 0.0)
        if has_res:
            r = r_ref[...].astype(jnp.float32)
            if res_affine:
                r = r * rs_ref[...] + rb_ref[...]
            out = out + r
        o_ref[...] = out.astype(o_ref.dtype)

    tile_spec = pl.BlockSpec((tr, tc), lambda i, j: (i, j))
    vec_spec = pl.BlockSpec((1, tc), lambda i, j: (0, j))

    inputs = [y, scale, shift]
    specs = [tile_spec, vec_spec, vec_spec]
    if has_res:
        inputs.append(res)
        specs.append(tile_spec)
        if res_affine:
            inputs += [res_scale, res_shift]
            specs += [vec_spec, vec_spec]

    out = pl.pallas_call(
        kernel,
        out_shape=jax.ShapeDtypeStruct((rows, width), out_dtype),
        grid=grid,
        in_specs=specs,
        out_specs=tile_spec,
        compiler_params=pltpu.CompilerParams(
            dimension_semantics=("parallel", "parallel"),
            vmem_limit_bytes=VMEM_LIMIT),
    )(*inputs)
    return out.reshape(Mp, C) if rep > 1 else out


# ------------------------------ JAX glue ------------------------------------

def im2col(x_nhwc, kh, kw, stride, pad):
    """Extract conv patches -> (N*Ho*Wo, kh*kw*C) in the input dtype (bf16 here,
    so the unavoidable 9x expansion is written at half width, exactly once)."""
    N, H, W, C = x_nhwc.shape
    Ho = (H + 2 * pad - kh) // stride + 1
    Wo = (W + 2 * pad - kw) // stride + 1
    xp = jnp.pad(x_nhwc, ((0, 0), (pad, pad), (pad, pad), (0, 0)))
    cols = []
    for dy in range(kh):
        for dx in range(kw):
            cols.append(xp[:, dy:dy + (Ho - 1) * stride + 1:stride,
                              dx:dx + (Wo - 1) * stride + 1:stride, :])
    a = jnp.stack(cols, axis=3)                    # (N, Ho, Wo, kh*kw, C)
    return a.reshape(N * Ho * Wo, kh * kw * C), (N, Ho, Wo)


def init_params(key, ch_in, ch_out):
    """Deterministic synthetic parameters (shapes match the PyTorch module)."""
    ks = jax.random.split(key, 6)
    f32 = jnp.float32
    p = {
        # conv1: 3x3, ch_in -> ch_out  (stored HWIO)
        "w1": jax.random.normal(ks[0], (3, 3, ch_in, ch_out), f32) * (1.0 / (3 * 3 * ch_in) ** 0.5),
        "b1": jax.random.normal(ks[1], (ch_out,), f32) * 0.1,
        "g1": jnp.ones((ch_out,), f32), "be1": jnp.zeros((ch_out,), f32),
        # conv2: 3x3, ch_out -> ch_out
        "w2": jax.random.normal(ks[2], (3, 3, ch_out, ch_out), f32) * (1.0 / (3 * 3 * ch_out) ** 0.5),
        "b2": jax.random.normal(ks[3], (ch_out,), f32) * 0.1,
        "g2": jnp.ones((ch_out,), f32), "be2": jnp.zeros((ch_out,), f32),
    }
    if ch_in != ch_out:
        p.update({
            # extra: 1x1 conv, ch_in -> ch_out, + BN
            "wsc": jax.random.normal(ks[4], (ch_in, ch_out), f32) * (1.0 / ch_in ** 0.5),
            "bsc": jax.random.normal(ks[5], (ch_out,), f32) * 0.1,
            "gsc": jnp.ones((ch_out,), f32), "besc": jnp.zeros((ch_out,), f32),
        })
    return p


def resblk_forward(x_nchw, params, ch_in, ch_out, stride):
    # NCHW in/out per the PyTorch spec; NHWC bf16 internally (single cast).
    x = jnp.transpose(x_nchw, (0, 2, 3, 1)).astype(MM_DTYPE)

    # conv1 (3x3, stride, pad 1) + BN stats from the matmul epilogue.
    a1, (N, Ho, Wo) = im2col(x, 3, 3, stride, 1)
    M = N * Ho * Wo
    y1, s1, q1 = matmul_stats(a1, params["w1"].reshape(3 * 3 * ch_in, ch_out))
    sc1, sh1 = _bn_scale_shift(s1, q1, params["g1"], params["be1"], M)
    o1 = bn_apply(y1, sc1, sh1, relu=True, out_dtype=MM_DTYPE)   # bf16 intermediate
    o1_nhwc = o1[:M].reshape(N, Ho, Wo, ch_out)

    # conv2 (3x3, stride 1, pad 1) + BN stats
    a2, _ = im2col(o1_nhwc, 3, 3, 1, 1)
    y2, s2, q2 = matmul_stats(a2, params["w2"].reshape(3 * 3 * ch_out, ch_out))
    sc2, sh2 = _bn_scale_shift(s2, q2, params["g2"], params["be2"], M)
    Mp = y2.shape[0]

    # Residual tail fused into ONE pass: BN2 FMA + shortcut-BN FMA + add.
    if ch_in != ch_out:
        xs = x[:, ::stride, ::stride, :].reshape(M, ch_in)        # bf16, no copy pad
        ysc, ss, qs = matmul_stats(xs, params["wsc"])
        scs, shs = _bn_scale_shift(ss, qs, params["gsc"], params["besc"], M)
        rsd = ysc[:Mp]
        if rsd.shape[0] < Mp:
            rsd = jnp.pad(rsd, ((0, Mp - rsd.shape[0]), (0, 0)))
        out = bn_apply(y2, sc2, sh2, res=rsd, res_scale=scs, res_shift=shs)
    else:
        assert stride == 1, "identity shortcut in ResBlk requires stride == 1"
        rsd = x.reshape(M, ch_in)
        if Mp > M:
            rsd = jnp.pad(rsd, ((0, Mp - M), (0, 0)))
        out = bn_apply(y2, sc2, sh2, res=rsd)

    out_nhwc = out[:M].reshape(N, Ho, Wo, ch_out)
    return jnp.transpose(out_nhwc, (0, 3, 1, 2))


# ------------------------- pure-JAX reference (check) ------------------------

def _q(v):
    # Mirror the kernel path's bf16 intermediates so the check stays tight.
    return v.astype(jnp.bfloat16).astype(jnp.float32)


def _bn_ref(y, g, b):
    """Mirror of the kernel's BN: batch stats from the f32 conv output, applied
    to its bf16-rounded copy (kernel stores y bf16, computes stats in f32)."""
    mean = y.mean(axis=(0, 1, 2), keepdims=True)
    var = ((y - mean) ** 2).mean(axis=(0, 1, 2), keepdims=True)
    return g * (_q(y) - mean) * lax.rsqrt(var + EPS) + b


def resblk_ref(x_nchw, params, ch_in, ch_out, stride):
    x = jnp.transpose(x_nchw, (0, 2, 3, 1)).astype(jnp.float32)
    xq = _q(x)
    dn = ("NHWC", "HWIO", "NHWC")
    hp = lax.Precision.HIGHEST
    y1 = lax.conv_general_dilated(xq, _q(params["w1"]), (stride, stride),
                                  [(1, 1), (1, 1)], dimension_numbers=dn,
                                  precision=hp) + params["b1"]
    o1 = _q(jnp.maximum(_bn_ref(y1, params["g1"], params["be1"]), 0.0))
    y2 = lax.conv_general_dilated(o1, _q(params["w2"]), (1, 1),
                                  [(1, 1), (1, 1)], dimension_numbers=dn,
                                  precision=hp) + params["b2"]
    o2 = _bn_ref(y2, params["g2"], params["be2"])
    if ch_in != ch_out:
        wsc = params["wsc"].reshape(1, 1, ch_in, ch_out)
        ysc = lax.conv_general_dilated(xq, _q(wsc), (stride, stride),
                                       [(0, 0), (0, 0)], dimension_numbers=dn,
                                       precision=hp) + params["bsc"]
        sc = _bn_ref(ysc, params["gsc"], params["besc"])
    else:
        sc = x
    return jnp.transpose(sc + o2, (0, 3, 1, 2))


# ----------------------------------- main ------------------------------------

if __name__ == "__main__":
    key = jax.random.PRNGKey(0)
    kx, kp = jax.random.split(key)

    ch_in, ch_out, stride = 4, 8, 2
    N, H, W = 2, 16, 16

    x = jax.random.normal(kx, (N, ch_in, H, W), jnp.float32)
    params = init_params(kp, ch_in, ch_out)

    fwd = jax.jit(functools.partial(resblk_forward, ch_in=ch_in, ch_out=ch_out,
                                    stride=stride))
    out = jax.block_until_ready(fwd(x, params))

    ref = resblk_ref(x, params, ch_in, ch_out, stride)
    assert out.shape == (N, ch_out, H // stride, W // stride), out.shape
    max_err = float(jnp.max(jnp.abs(out - ref)))
    # Tolerance covers the bf16 conv-output intermediates (perf review item #2)
    # interacting with the reference's (mathematically no-op) conv biases.
    assert jnp.allclose(out, ref, atol=3e-2, rtol=3e-2), max_err

    print("KERNEL_OK")
</pallas_src>

<mosaic_0001>
module attributes {stable_mosaic.version = 11 : i64} {
  func.func @_matmul_stats_kernel(%arg0: i32, %arg1: i32, %arg2: i32, %arg3: memref<128x4xbf16, #tpu.memory_space<vmem>>, %arg4: memref<4x8xbf16, #tpu.memory_space<vmem>>, %arg5: memref<128x8xbf16, #tpu.memory_space<vmem>>, %arg6: memref<1x1x8xf32, #tpu.memory_space<vmem>>, %arg7: memref<1x1x8xf32, #tpu.memory_space<vmem>>, %arg8: memref<128x8xf32, #tpu.memory_space<vmem>>) attributes {dimension_semantics = [#tpu.dimension_semantics<parallel>, #tpu.dimension_semantics<parallel>, #tpu.dimension_semantics<arbitrary>], iteration_bounds = array<i64: 1, 1, 1>, scalar_prefetch = 0 : i64, scratch_operands = 1 : i64, tpu.core_type = #tpu.core_type<tc>, window_params = [{transform_indices = @transform_0, window_bounds = array<i64: 128, 4>}, {transform_indices = @transform_1, window_bounds = array<i64: 4, 8>}, {transform_indices = @transform_2, window_bounds = array<i64: 128, 8>}, {transform_indices = @transform_3, window_bounds = array<i64: 1, 1, 8>}, {transform_indices = @transform_4, window_bounds = array<i64: 1, 1, 8>}]} {
    %c0_i32 = arith.constant 0 : i32
    %0 = arith.cmpi eq, %arg2, %c0_i32 : i32
    %1 = arith.extui %0 : i1 to i32
    %c0_i32_0 = arith.constant 0 : i32
    %2 = arith.cmpi ne, %1, %c0_i32_0 : i32
    scf.if %2 {
      %cst_10 = arith.constant 0.000000e+00 : f32
      %12 = vector.broadcast %cst_10 : f32 to vector<128x8xf32>
      %c0_11 = arith.constant 0 : index
      %c0_12 = arith.constant 0 : index
      %13 = vector.load %arg8[%c0_11, %c0_12] : memref<128x8xf32, #tpu.memory_space<vmem>>, vector<128x8xf32>
      tpu.vector_store %arg8[%c0_11, %c0_12], %12 {strides = array<i32>} : memref<128x8xf32, #tpu.memory_space<vmem>>, vector<128x8xf32>,
    } else {
    }
    %c0 = arith.constant 0 : index
    %c0_1 = arith.constant 0 : index
    %3 = vector.load %arg8[%c0, %c0_1] : memref<128x8xf32, #tpu.memory_space<vmem>>, vector<128x8xf32>
    %c0_2 = arith.constant 0 : index
    %c0_3 = arith.constant 0 : index
    %4 = vector.load %arg3[%c0_2, %c0_3] : memref<128x4xbf16, #tpu.memory_space<vmem>>, vector<128x4xbf16>
    %c0_4 = arith.constant 0 : index
    %c0_5 = arith.constant 0 : index
    %5 = vector.load %arg4[%c0_4, %c0_5] : memref<4x8xbf16, #tpu.memory_space<vmem>>, vector<4x8xbf16>
    %cst = arith.constant dense<0.000000e+00> : vector<128x8xf32>
    %6 = tpu.matmul %4, %5, %cst {dimension_numbers = #tpu.dot_dimension_numbers<[1], [0], [0], [1], [0, 0, 1, 1], [], []>} : vector<128x4xbf16>, vector<4x8xbf16>, vector<128x8xf32> -> vector<128x8xf32>
    %7 = arith.addf %3, %6 : vector<128x8xf32>
    %c0_6 = arith.constant 0 : index
    %c0_7 = arith.constant 0 : index
    %8 = vector.load %arg8[%c0_6, %c0_7] : memref<128x8xf32, #tpu.memory_space<vmem>>, vector<128x8xf32>
    tpu.vector_store %arg8[%c0_6, %c0_7], %7 {strides = array<i32>} : memref<128x8xf32, #tpu.memory_space<vmem>>, vector<128x8xf32>,
    %c0_i32_8 = arith.constant 0 : i32
    %9 = arith.cmpi eq, %arg2, %c0_i32_8 : i32
    %10 = arith.extui %9 : i1 to i32
    %c0_i32_9 = arith.constant 0 : i32
    %11 = arith.cmpi ne, %10, %c0_i32_9 : i32
    scf.if %11 {
      %c0_10 = arith.constant 0 : index
      %c0_11 = arith.constant 0 : index
      %12 = vector.load %arg8[%c0_10, %c0_11] : memref<128x8xf32, #tpu.memory_space<vmem>>, vector<128x8xf32>
      %13 = arith.truncf %12 : vector<128x8xf32> to vector<128x8xbf16>
      %c0_12 = arith.constant 0 : index
      %c0_13 = arith.constant 0 : index
      %14 = vector.load %arg5[%c0_12, %c0_13] : memref<128x8xbf16, #tpu.memory_space<vmem>>, vector<128x8xbf16>
      tpu.vector_store %arg5[%c0_12, %c0_13], %13 {strides = array<i32>} : memref<128x8xbf16, #tpu.memory_space<vmem>>, vector<128x8xbf16>,
      %cst_14 = arith.constant dense<0.000000e+00> : vector<8xf32>
      %15 = vector.multi_reduction <add>, %12, %cst_14 [0] : vector<128x8xf32> to vector<8xf32>
      %16 = vector.shape_cast %15 : vector<8xf32> to vector<1x8xf32>
      %17 = vector.shape_cast %16 : vector<1x8xf32> to vector<1x1x8xf32>
      %c0_15 = arith.constant 0 : index
      %c0_16 = arith.constant 0 : index
      %c0_17 = arith.constant 0 : index
      %18 = vector.load %arg6[%c0_15, %c0_16, %c0_17] : memref<1x1x8xf32, #tpu.memory_space<vmem>>, vector<1x1x8xf32>
      tpu.vector_store %arg6[%c0_15, %c0_16, %c0_17], %17 {strides = array<i32>} : memref<1x1x8xf32, #tpu.memory_space<vmem>>, vector<1x1x8xf32>,
      %19 = arith.mulf %12, %12 : vector<128x8xf32>
      %cst_18 = arith.constant dense<0.000000e+00> : vector<8xf32>
      %20 = vector.multi_reduction <add>, %19, %cst_18 [0] : vector<128x8xf32> to vector<8xf32>
      %21 = vector.shape_cast %20 : vector<8xf32> to vector<1x8xf32>
      %22 = vector.shape_cast %21 : vector<1x8xf32> to vector<1x1x8xf32>
      %c0_19 = arith.constant 0 : index
      %c0_20 = arith.constant 0 : index
      %c0_21 = arith.constant 0 : index
      %23 = vector.load %arg7[%c0_19, %c0_20, %c0_21] : memref<1x1x8xf32, #tpu.memory_space<vmem>>, vector<1x1x8xf32>
      tpu.vector_store %arg7[%c0_19, %c0_20, %c0_21], %22 {strides = array<i32>} : memref<1x1x8xf32, #tpu.memory_space<vmem>>, vector<1x1x8xf32>,
    } else {
    }
    return
  }
  func.func @transform_0(%arg0: i32, %arg1: i32, %arg2: i32) -> (i32, i32) {
    %c0_i32 = arith.constant 0 : i32
    return %arg0, %arg2 : i32, i32
  }
  func.func @transform_1(%arg0: i32, %arg1: i32, %arg2: i32) -> (i32, i32) {
    %c0_i32 = arith.constant 0 : i32
    return %arg2, %arg1 : i32, i32
  }
  func.func @transform_2(%arg0: i32, %arg1: i32, %arg2: i32) -> (i32, i32) {
    %c0_i32 = arith.constant 0 : i32
    return %arg0, %arg1 : i32, i32
  }
  func.func @transform_3(%arg0: i32, %arg1: i32, %arg2: i32) -> (i32, i32, i32) {
    %c0_i32 = arith.constant 0 : i32
    %c0_i32_0 = arith.constant 0 : i32
    return %arg0, %c0_i32, %arg1 : i32, i32, i32
  }
  func.func @transform_4(%arg0: i32, %arg1: i32, %arg2: i32) -> (i32, i32, i32) {
    %c0_i32 = arith.constant 0 : i32
    %c0_i32_0 = arith.constant 0 : i32
    return %arg0, %c0_i32, %arg1 : i32, i32, i32
  }
}

module attributes {stable_mosaic.version = 11 : i64} {
  func.func @kernel(%arg0: i32, %arg1: i32, %arg2: memref<8x128xbf16, #tpu.memory_space<vmem>>, %arg3: memref<1x128xf32, #tpu.memory_space<vmem>>, %arg4: memref<1x128xf32, #tpu.memory_space<vmem>>, %arg5: memref<8x128xbf16, #tpu.memory_space<vmem>>) attributes {dimension_semantics = [#tpu.dimension_semantics<parallel>, #tpu.dimension_semantics<parallel>], iteration_bounds = array<i64: 1, 1>, scalar_prefetch = 0 : i64, scratch_operands = 0 : i64, tpu.core_type = #tpu.core_type<tc>, window_params = [{transform_indices = @transform_0, window_bounds = array<i64: 8, 128>}, {transform_indices = @transform_1, window_bounds = array<i64: 1, 128>}, {transform_indices = @transform_2, window_bounds = array<i64: 1, 128>}, {transform_indices = @transform_3, window_bounds = array<i64: 8, 128>}]} {
    %c0 = arith.constant 0 : index
    %c0_0 = arith.constant 0 : index
    %0 = vector.load %arg2[%c0, %c0_0] : memref<8x128xbf16, #tpu.memory_space<vmem>>, vector<8x128xbf16>
    %1 = arith.extf %0 : vector<8x128xbf16> to vector<8x128xf32>
    %c0_1 = arith.constant 0 : index
    %c0_2 = arith.constant 0 : index
    %2 = vector.load %arg3[%c0_1, %c0_2] : memref<1x128xf32, #tpu.memory_space<vmem>>, vector<1x128xf32>
    %3 = vector.broadcast %2 : vector<1x128xf32> to vector<8x128xf32>
    %4 = arith.mulf %1, %3 : vector<8x128xf32>
    %c0_3 = arith.constant 0 : index
    %c0_4 = arith.constant 0 : index
    %5 = vector.load %arg4[%c0_3, %c0_4] : memref<1x128xf32, #tpu.memory_space<vmem>>, vector<1x128xf32>
    %6 = vector.broadcast %5 : vector<1x128xf32> to vector<8x128xf32>
    %7 = arith.addf %4, %6 : vector<8x128xf32>
    %cst = arith.constant 0.000000e+00 : f32
    %8 = vector.broadcast %cst : f32 to vector<8x128xf32>
    %9 = arith.maximumf %7, %8 : vector<8x128xf32>
    %10 = arith.truncf %9 : vector<8x128xf32> to vector<8x128xbf16>
    %c0_5 = arith.constant 0 : index
    %c0_6 = arith.constant 0 : index
    %11 = vector.load %arg5[%c0_5, %c0_6] : memref<8x128xbf16, #tpu.memory_space<vmem>>, vector<8x128xbf16>
    tpu.vector_store %arg5[%c0_5, %c0_6], %10 {strides = array<i32>} : memref<8x128xbf16, #tpu.memory_space<vmem>>, vector<8x128xbf16>,
    return
  }
  func.func @transform_0(%arg0: i32, %arg1: i32) -> (i32, i32) {
    %c0_i32 = arith.constant 0 : i32
    return %arg0, %arg1 : i32, i32
  }
  func.func @transform_1(%arg0: i32, %arg1: i32) -> (i32, i32) {
    %c0_i32 = arith.constant 0 : i32
    %c0_i32_0 = arith.constant 0 : i32
    return %c0_i32, %arg1 : i32, i32
  }
  func.func @transform_2(%arg0: i32, %arg1: i32) -> (i32, i32) {
    %c0_i32 = arith.constant 0 : i32
    %c0_i32_0 = arith.constant 0 : i32
    return %c0_i32, %arg1 : i32, i32
  }
  func.func @transform_3(%arg0: i32, %arg1: i32) -> (i32, i32) {
    %c0_i32 = arith.constant 0 : i32
    return %arg0, %arg1 : i32, i32
  }
}

module attributes {stable_mosaic.version = 11 : i64} {
  func.func @_matmul_stats_kernel(%arg0: i32, %arg1: i32, %arg2: i32, %arg3: memref<128x36xbf16, #tpu.memory_space<vmem>>, %arg4: memref<36x8xbf16, #tpu.memory_space<vmem>>, %arg5: memref<128x8xbf16, #tpu.memory_space<vmem>>, %arg6: memref<1x1x8xf32, #tpu.memory_space<vmem>>, %arg7: memref<1x1x8xf32, #tpu.memory_space<vmem>>, %arg8: memref<128x8xf32, #tpu.memory_space<vmem>>) attributes {dimension_semantics = [#tpu.dimension_semantics<parallel>, #tpu.dimension_semantics<parallel>, #tpu.dimension_semantics<arbitrary>], iteration_bounds = array<i64: 1, 1, 1>, scalar_prefetch = 0 : i64, scratch_operands = 1 : i64, tpu.core_type = #tpu.core_type<tc>, window_params = [{transform_indices = @transform_0, window_bounds = array<i64: 128, 36>}, {transform_indices = @transform_1, window_bounds = array<i64: 36, 8>}, {transform_indices = @transform_2, window_bounds = array<i64: 128, 8>}, {transform_indices = @transform_3, window_bounds = array<i64: 1, 1, 8>}, {transform_indices = @transform_4, window_bounds = array<i64: 1, 1, 8>}]} {
    %c0_i32 = arith.constant 0 : i32
    %0 = arith.cmpi eq, %arg2, %c0_i32 : i32
    %1 = arith.extui %0 : i1 to i32
    %c0_i32_0 = arith.constant 0 : i32
    %2 = arith.cmpi ne, %1, %c0_i32_0 : i32
    scf.if %2 {
      %cst_10 = arith.constant 0.000000e+00 : f32
      %12 = vector.broadcast %cst_10 : f32 to vector<128x8xf32>
      %c0_11 = arith.constant 0 : index
      %c0_12 = arith.constant 0 : index
      %13 = vector.load %arg8[%c0_11, %c0_12] : memref<128x8xf32, #tpu.memory_space<vmem>>, vector<128x8xf32>
      tpu.vector_store %arg8[%c0_11, %c0_12], %12 {strides = array<i32>} : memref<128x8xf32, #tpu.memory_space<vmem>>, vector<128x8xf32>,
    } else {
    }
    %c0 = arith.constant 0 : index
    %c0_1 = arith.constant 0 : index
    %3 = vector.load %arg8[%c0, %c0_1] : memref<128x8xf32, #tpu.memory_space<vmem>>, vector<128x8xf32>
    %c0_2 = arith.constant 0 : index
    %c0_3 = arith.constant 0 : index
    %4 = vector.load %arg3[%c0_2, %c0_3] : memref<128x36xbf16, #tpu.memory_space<vmem>>, vector<128x36xbf16>
    %c0_4 = arith.constant 0 : index
    %c0_5 = arith.constant 0 : index
    %5 = vector.load %arg4[%c0_4, %c0_5] : memref<36x8xbf16, #tpu.memory_space<vmem>>, vector<36x8xbf16>
    %cst = arith.constant dense<0.000000e+00> : vector<128x8xf32>
    %6 = tpu.matmul %4, %5, %cst {dimension_numbers = #tpu.dot_dimension_numbers<[1], [0], [0], [1], [0, 0, 1, 1], [], []>} : vector<128x36xbf16>, vector<36x8xbf16>, vector<128x8xf32> -> vector<128x8xf32>
    %7 = arith.addf %3, %6 : vector<128x8xf32>
    %c0_6 = arith.constant 0 : index
    %c0_7 = arith.constant 0 : index
    %8 = vector.load %arg8[%c0_6, %c0_7] : memref<128x8xf32, #tpu.memory_space<vmem>>, vector<128x8xf32>
    tpu.vector_store %arg8[%c0_6, %c0_7], %7 {strides = array<i32>} : memref<128x8xf32, #tpu.memory_space<vmem>>, vector<128x8xf32>,
    %c0_i32_8 = arith.constant 0 : i32
    %9 = arith.cmpi eq, %arg2, %c0_i32_8 : i32
    %10 = arith.extui %9 : i1 to i32
    %c0_i32_9 = arith.constant 0 : i32
    %11 = arith.cmpi ne, %10, %c0_i32_9 : i32
    scf.if %11 {
      %c0_10 = arith.constant 0 : index
      %c0_11 = arith.constant 0 : index
      %12 = vector.load %arg8[%c0_10, %c0_11] : memref<128x8xf32, #tpu.memory_space<vmem>>, vector<128x8xf32>
      %13 = arith.truncf %12 : vector<128x8xf32> to vector<128x8xbf16>
      %c0_12 = arith.constant 0 : index
      %c0_13 = arith.constant 0 : index
      %14 = vector.load %arg5[%c0_12, %c0_13] : memref<128x8xbf16, #tpu.memory_space<vmem>>, vector<128x8xbf16>
      tpu.vector_store %arg5[%c0_12, %c0_13], %13 {strides = array<i32>} : memref<128x8xbf16, #tpu.memory_space<vmem>>, vector<128x8xbf16>,
      %cst_14 = arith.constant dense<0.000000e+00> : vector<8xf32>
      %15 = vector.multi_reduction <add>, %12, %cst_14 [0] : vector<128x8xf32> to vector<8xf32>
      %16 = vector.shape_cast %15 : vector<8xf32> to vector<1x8xf32>
      %17 = vector.shape_cast %16 : vector<1x8xf32> to vector<1x1x8xf32>
      %c0_15 = arith.constant 0 : index
      %c0_16 = arith.constant 0 : index
      %c0_17 = arith.constant 0 : index
      %18 = vector.load %arg6[%c0_15, %c0_16, %c0_17] : memref<1x1x8xf32, #tpu.memory_space<vmem>>, vector<1x1x8xf32>
      tpu.vector_store %arg6[%c0_15, %c0_16, %c0_17], %17 {strides = array<i32>} : memref<1x1x8xf32, #tpu.memory_space<vmem>>, vector<1x1x8xf32>,
      %19 = arith.mulf %12, %12 : vector<128x8xf32>
      %cst_18 = arith.constant dense<0.000000e+00> : vector<8xf32>
      %20 = vector.multi_reduction <add>, %19, %cst_18 [0] : vector<128x8xf32> to vector<8xf32>
      %21 = vector.shape_cast %20 : vector<8xf32> to vector<1x8xf32>
      %22 = vector.shape_cast %21 : vector<1x8xf32> to vector<1x1x8xf32>
      %c0_19 = arith.constant 0 : index
      %c0_20 = arith.constant 0 : index
      %c0_21 = arith.constant 0 : index
      %23 = vector.load %arg7[%c0_19, %c0_20, %c0_21] : memref<1x1x8xf32, #tpu.memory_space<vmem>>, vector<1x1x8xf32>
      tpu.vector_store %arg7[%c0_19, %c0_20, %c0_21], %22 {strides = array<i32>} : memref<1x1x8xf32, #tpu.memory_space<vmem>>, vector<1x1x8xf32>,
    } else {
    }
    return
  }
  func.func @transform_0(%arg0: i32, %arg1: i32, %arg2: i32) -> (i32, i32) {
    %c0_i32 = arith.constant 0 : i32
    return %arg0, %arg2 : i32, i32
  }
  func.func @transform_1(%arg0: i32, %arg1: i32, %arg2: i32) -> (i32, i32) {
    %c0_i32 = arith.constant 0 : i32
    return %arg2, %arg1 : i32, i32
  }
  func.func @transform_2(%arg0: i32, %arg1: i32, %arg2: i32) -> (i32, i32) {
    %c0_i32 = arith.constant 0 : i32
    return %arg0, %arg1 : i32, i32
  }
  func.func @transform_3(%arg0: i32, %arg1: i32, %arg2: i32) -> (i32, i32, i32) {
    %c0_i32 = arith.constant 0 : i32
    %c0_i32_0 = arith.constant 0 : i32
    return %arg0, %c0_i32, %arg1 : i32, i32, i32
  }
  func.func @transform_4(%arg0: i32, %arg1: i32, %arg2: i32) -> (i32, i32, i32) {
    %c0_i32 = arith.constant 0 : i32
    %c0_i32_0 = arith.constant 0 : i32
    return %arg0, %c0_i32, %arg1 : i32, i32, i32
  }
}

module attributes {stable_mosaic.version = 11 : i64} {
  func.func @_matmul_stats_kernel(%arg0: i32, %arg1: i32, %arg2: i32, %arg3: memref<128x72xbf16, #tpu.memory_space<vmem>>, %arg4: memref<72x8xbf16, #tpu.memory_space<vmem>>, %arg5: memref<128x8xbf16, #tpu.memory_space<vmem>>, %arg6: memref<1x1x8xf32, #tpu.memory_space<vmem>>, %arg7: memref<1x1x8xf32, #tpu.memory_space<vmem>>, %arg8: memref<128x8xf32, #tpu.memory_space<vmem>>) attributes {dimension_semantics = [#tpu.dimension_semantics<parallel>, #tpu.dimension_semantics<parallel>, #tpu.dimension_semantics<arbitrary>], iteration_bounds = array<i64: 1, 1, 1>, scalar_prefetch = 0 : i64, scratch_operands = 1 : i64, tpu.core_type = #tpu.core_type<tc>, window_params = [{transform_indices = @transform_0, window_bounds = array<i64: 128, 72>}, {transform_indices = @transform_1, window_bounds = array<i64: 72, 8>}, {transform_indices = @transform_2, window_bounds = array<i64: 128, 8>}, {transform_indices = @transform_3, window_bounds = array<i64: 1, 1, 8>}, {transform_indices = @transform_4, window_bounds = array<i64: 1, 1, 8>}]} {
    %c0_i32 = arith.constant 0 : i32
    %0 = arith.cmpi eq, %arg2, %c0_i32 : i32
    %1 = arith.extui %0 : i1 to i32
    %c0_i32_0 = arith.constant 0 : i32
    %2 = arith.cmpi ne, %1, %c0_i32_0 : i32
    scf.if %2 {
      %cst_10 = arith.constant 0.000000e+00 : f32
      %12 = vector.broadcast %cst_10 : f32 to vector<128x8xf32>
      %c0_11 = arith.constant 0 : index
      %c0_12 = arith.constant 0 : index
      %13 = vector.load %arg8[%c0_11, %c0_12] : memref<128x8xf32, #tpu.memory_space<vmem>>, vector<128x8xf32>
      tpu.vector_store %arg8[%c0_11, %c0_12], %12 {strides = array<i32>} : memref<128x8xf32, #tpu.memory_space<vmem>>, vector<128x8xf32>,
    } else {
    }
    %c0 = arith.constant 0 : index
    %c0_1 = arith.constant 0 : index
    %3 = vector.load %arg8[%c0, %c0_1] : memref<128x8xf32, #tpu.memory_space<vmem>>, vector<128x8xf32>
    %c0_2 = arith.constant 0 : index
    %c0_3 = arith.constant 0 : index
    %4 = vector.load %arg3[%c0_2, %c0_3] : memref<128x72xbf16, #tpu.memory_space<vmem>>, vector<128x72xbf16>
    %c0_4 = arith.constant 0 : index
    %c0_5 = arith.constant 0 : index
    %5 = vector.load %arg4[%c0_4, %c0_5] : memref<72x8xbf16, #tpu.memory_space<vmem>>, vector<72x8xbf16>
    %cst = arith.constant dense<0.000000e+00> : vector<128x8xf32>
    %6 = tpu.matmul %4, %5, %cst {dimension_numbers = #tpu.dot_dimension_numbers<[1], [0], [0], [1], [0, 0, 1, 1], [], []>} : vector<128x72xbf16>, vector<72x8xbf16>, vector<128x8xf32> -> vector<128x8xf32>
    %7 = arith.addf %3, %6 : vector<128x8xf32>
    %c0_6 = arith.constant 0 : index
    %c0_7 = arith.constant 0 : index
    %8 = vector.load %arg8[%c0_6, %c0_7] : memref<128x8xf32, #tpu.memory_space<vmem>>, vector<128x8xf32>
    tpu.vector_store %arg8[%c0_6, %c0_7], %7 {strides = array<i32>} : memref<128x8xf32, #tpu.memory_space<vmem>>, vector<128x8xf32>,
    %c0_i32_8 = arith.constant 0 : i32
    %9 = arith.cmpi eq, %arg2, %c0_i32_8 : i32
    %10 = arith.extui %9 : i1 to i32
    %c0_i32_9 = arith.constant 0 : i32
    %11 = arith.cmpi ne, %10, %c0_i32_9 : i32
    scf.if %11 {
      %c0_10 = arith.constant 0 : index
      %c0_11 = arith.constant 0 : index
      %12 = vector.load %arg8[%c0_10, %c0_11] : memref<128x8xf32, #tpu.memory_space<vmem>>, vector<128x8xf32>
      %13 = arith.truncf %12 : vector<128x8xf32> to vector<128x8xbf16>
      %c0_12 = arith.constant 0 : index
      %c0_13 = arith.constant 0 : index
      %14 = vector.load %arg5[%c0_12, %c0_13] : memref<128x8xbf16, #tpu.memory_space<vmem>>, vector<128x8xbf16>
      tpu.vector_store %arg5[%c0_12, %c0_13], %13 {strides = array<i32>} : memref<128x8xbf16, #tpu.memory_space<vmem>>, vector<128x8xbf16>,
      %cst_14 = arith.constant dense<0.000000e+00> : vector<8xf32>
      %15 = vector.multi_reduction <add>, %12, %cst_14 [0] : vector<128x8xf32> to vector<8xf32>
      %16 = vector.shape_cast %15 : vector<8xf32> to vector<1x8xf32>
      %17 = vector.shape_cast %16 : vector<1x8xf32> to vector<1x1x8xf32>
      %c0_15 = arith.constant 0 : index
      %c0_16 = arith.constant 0 : index
      %c0_17 = arith.constant 0 : index
      %18 = vector.load %arg6[%c0_15, %c0_16, %c0_17] : memref<1x1x8xf32, #tpu.memory_space<vmem>>, vector<1x1x8xf32>
      tpu.vector_store %arg6[%c0_15, %c0_16, %c0_17], %17 {strides = array<i32>} : memref<1x1x8xf32, #tpu.memory_space<vmem>>, vector<1x1x8xf32>,
      %19 = arith.mulf %12, %12 : vector<128x8xf32>
      %cst_18 = arith.constant dense<0.000000e+00> : vector<8xf32>
      %20 = vector.multi_reduction <add>, %19, %cst_18 [0] : vector<128x8xf32> to vector<8xf32>
      %21 = vector.shape_cast %20 : vector<8xf32> to vector<1x8xf32>
      %22 = vector.shape_cast %21 : vector<1x8xf32> to vector<1x1x8xf32>
      %c0_19 = arith.constant 0 : index
      %c0_20 = arith.constant 0 : index
      %c0_21 = arith.constant 0 : index
      %23 = vector.load %arg7[%c0_19, %c0_20, %c0_21] : memref<1x1x8xf32, #tpu.memory_space<vmem>>, vector<1x1x8xf32>
      tpu.vector_store %arg7[%c0_19, %c0_20, %c0_21], %22 {strides = array<i32>} : memref<1x1x8xf32, #tpu.memory_space<vmem>>, vector<1x1x8xf32>,
    } else {
    }
    return
  }
  func.func @transform_0(%arg0: i32, %arg1: i32, %arg2: i32) -> (i32, i32) {
    %c0_i32 = arith.constant 0 : i32
    return %arg0, %arg2 : i32, i32
  }
  func.func @transform_1(%arg0: i32, %arg1: i32, %arg2: i32) -> (i32, i32) {
    %c0_i32 = arith.constant 0 : i32
    return %arg2, %arg1 : i32, i32
  }
  func.func @transform_2(%arg0: i32, %arg1: i32, %arg2: i32) -> (i32, i32) {
    %c0_i32 = arith.constant 0 : i32
    return %arg0, %arg1 : i32, i32
  }
  func.func @transform_3(%arg0: i32, %arg1: i32, %arg2: i32) -> (i32, i32, i32) {
    %c0_i32 = arith.constant 0 : i32
    %c0_i32_0 = arith.constant 0 : i32
    return %arg0, %c0_i32, %arg1 : i32, i32, i32
  }
  func.func @transform_4(%arg0: i32, %arg1: i32, %arg2: i32) -> (i32, i32, i32) {
    %c0_i32 = arith.constant 0 : i32
    %c0_i32_0 = arith.constant 0 : i32
    return %arg0, %c0_i32, %arg1 : i32, i32, i32
  }
}

module attributes {stable_mosaic.version = 11 : i64} {
  func.func @kernel(%arg0: i32, %arg1: i32, %arg2: memref<8x128xbf16, #tpu.memory_space<vmem>>, %arg3: memref<1x128xf32, #tpu.memory_space<vmem>>, %arg4: memref<1x128xf32, #tpu.memory_space<vmem>>, %arg5: memref<8x128xbf16, #tpu.memory_space<vmem>>, %arg6: memref<1x128xf32, #tpu.memory_space<vmem>>, %arg7: memref<1x128xf32, #tpu.memory_space<vmem>>, %arg8: memref<8x128xf32, #tpu.memory_space<vmem>>) attributes {dimension_semantics = [#tpu.dimension_semantics<parallel>, #tpu.dimension_semantics<parallel>], iteration_bounds = array<i64: 1, 1>, scalar_prefetch = 0 : i64, scratch_operands = 0 : i64, tpu.core_type = #tpu.core_type<tc>, window_params = [{transform_indices = @transform_0, window_bounds = array<i64: 8, 128>}, {transform_indices = @transform_1, window_bounds = array<i64: 1, 128>}, {transform_indices = @transform_2, window_bounds = array<i64: 1, 128>}, {transform_indices = @transform_3, window_bounds = array<i64: 8, 128>}, {transform_indices = @transform_4, window_bounds = array<i64: 1, 128>}, {transform_indices = @transform_5, window_bounds = array<i64: 1, 128>}, {transform_indices = @transform_6, window_bounds = array<i64: 8, 128>}]} {
    %c0 = arith.constant 0 : index
    %c0_0 = arith.constant 0 : index
    %0 = vector.load %arg2[%c0, %c0_0] : memref<8x128xbf16, #tpu.memory_space<vmem>>, vector<8x128xbf16>
    %1 = arith.extf %0 : vector<8x128xbf16> to vector<8x128xf32>
    %c0_1 = arith.constant 0 : index
    %c0_2 = arith.constant 0 : index
    %2 = vector.load %arg3[%c0_1, %c0_2] : memref<1x128xf32, #tpu.memory_space<vmem>>, vector<1x128xf32>
    %3 = vector.broadcast %2 : vector<1x128xf32> to vector<8x128xf32>
    %4 = arith.mulf %1, %3 : vector<8x128xf32>
    %c0_3 = arith.constant 0 : index
    %c0_4 = arith.constant 0 : index
    %5 = vector.load %arg4[%c0_3, %c0_4] : memref<1x128xf32, #tpu.memory_space<vmem>>, vector<1x128xf32>
    %6 = vector.broadcast %5 : vector<1x128xf32> to vector<8x128xf32>
    %7 = arith.addf %4, %6 : vector<8x128xf32>
    %c0_5 = arith.constant 0 : index
    %c0_6 = arith.constant 0 : index
    %8 = vector.load %arg5[%c0_5, %c0_6] : memref<8x128xbf16, #tpu.memory_space<vmem>>, vector<8x128xbf16>
    %9 = arith.extf %8 : vector<8x128xbf16> to vector<8x128xf32>
    %c0_7 = arith.constant 0 : index
    %c0_8 = arith.constant 0 : index
    %10 = vector.load %arg6[%c0_7, %c0_8] : memref<1x128xf32, #tpu.memory_space<vmem>>, vector<1x128xf32>
    %11 = vector.broadcast %10 : vector<1x128xf32> to vector<8x128xf32>
    %12 = arith.mulf %9, %11 : vector<8x128xf32>
    %c0_9 = arith.constant 0 : index
    %c0_10 = arith.constant 0 : index
    %13 = vector.load %arg7[%c0_9, %c0_10] : memref<1x128xf32, #tpu.memory_space<vmem>>, vector<1x128xf32>
    %14 = vector.broadcast %13 : vector<1x128xf32> to vector<8x128xf32>
    %15 = arith.addf %12, %14 : vector<8x128xf32>
    %16 = arith.addf %7, %15 : vector<8x128xf32>
    %c0_11 = arith.constant 0 : index
    %c0_12 = arith.constant 0 : index
    %17 = vector.load %arg8[%c0_11, %c0_12] : memref<8x128xf32, #tpu.memory_space<vmem>>, vector<8x128xf32>
    tpu.vector_store %arg8[%c0_11, %c0_12], %16 {strides = array<i32>} : memref<8x128xf32, #tpu.memory_space<vmem>>, vector<8x128xf32>,
    return
  }
  func.func @transform_0(%arg0: i32, %arg1: i32) -> (i32, i32) {
    %c0_i32 = arith.constant 0 : i32
    return %arg0, %arg1 : i32, i32
  }
  func.func @transform_1(%arg0: i32, %arg1: i32) -> (i32, i32) {
    %c0_i32 = arith.constant 0 : i32
    %c0_i32_0 = arith.constant 0 : i32
    return %c0_i32, %arg1 : i32, i32
  }
  func.func @transform_2(%arg0: i32, %arg1: i32) -> (i32, i32) {
    %c0_i32 = arith.constant 0 : i32
    %c0_i32_0 = arith.constant 0 : i32
    return %c0_i32, %arg1 : i32, i32
  }
  func.func @transform_3(%arg0: i32, %arg1: i32) -> (i32, i32) {
    %c0_i32 = arith.constant 0 : i32
    return %arg0, %arg1 : i32, i32
  }
  func.func @transform_4(%arg0: i32, %arg1: i32) -> (i32, i32) {
    %c0_i32 = arith.constant 0 : i32
    %c0_i32_0 = arith.constant 0 : i32
    return %c0_i32, %arg1 : i32, i32
  }
  func.func @transform_5(%arg0: i32, %arg1: i32) -> (i32, i32) {
    %c0_i32 = arith.constant 0 : i32
    %c0_i32_0 = arith.constant 0 : i32
    return %c0_i32, %arg1 : i32, i32
  }
  func.func @transform_6(%arg0: i32, %arg1: i32) -> (i32, i32) {
    %c0_i32 = arith.constant 0 : i32
    return %arg0, %arg1 : i32, i32
  }
}

</mosaic_0001>

<llo_original>
// kernel: resblk_forward.6
$region0: #{resblk_forward.6}
  #allocation0 [shape = 'u32[]', space=smem, size = 0x4, offset = 0x4, fixed_abs, tag = 'smem constant byte address 0x4 - core index']
  #allocation1 [shape = 'u32[144,128]{1,0:T(1,128)}', space=vmem, size = 0x12000, scoped, tag = 'internal scratch']
  %s0 = inlined_call_operand.vmem [shape: bf16[8,128], index: 0, kind: input, shape index: {}]
  %s1 = inlined_call_operand.vmem [shape: f32[1,128], index: 1, kind: input, shape index: {}]
  %s2 = inlined_call_operand.vmem [shape: f32[1,128], index: 2, kind: input, shape index: {}]
  %s3 = inlined_call_operand.vmem [shape: bf16[8,128], index: 3, kind: output, shape index: {}]
  %s4 = sld [smem:[#allocation0]]
  $region22: #{resblk_forward.6} parent=0
    _
  %s6 = ssub.s32 1, %s4
  %s7 = scalar_select 0, %s6, %s4
  // Predicated region
  $region2: #{resblk_forward.6} parent=0 // pred_check
    _
  $region3: #{resblk_forward.6} parent=0 // pred_check_branch
    %9 = sbr.rel (0) target = $region5
  $region4: #{resblk_forward.6} parent=0 // pred_region
    _
  $region5: #{resblk_forward.6} parent=0 // pred_fallthru
    _
  // Predicated region
  $region6: #{resblk_forward.6} parent=0 // pred_check
    _
  $region7: #{resblk_forward.6} parent=0 // pred_check_branch
    %11 = sbr.rel (0) target = $region9
  $region8: #{resblk_forward.6} parent=0 // pred_region
    _
  $region9: #{resblk_forward.6} parent=0 // pred_fallthru
    _
  // Predicated region
  $region10: #{resblk_forward.6} parent=0 // pred_check
    _
  $region11: #{resblk_forward.6} parent=0 // pred_check_branch
    %13 = sbr.rel (0) target = $region13
  $region12: #{resblk_forward.6} parent=0 // pred_region
    _
  $region13: #{resblk_forward.6} parent=0 // pred_fallthru
    _
  %v14 = vld [vmem:[%s0] sm:$0xf]
  %v15 = vunpack.c.l.bf16 %v14
  %v16 = vld [vmem:[%s1] sm:$0x1]
  %v18 = vlaneseq
  %v19 = vshrl.u32 %v18, 7
  %v20 = vsub.s32 0, %v19
  %v21 = vrot.slane %v16, %v20
  %v23 = vmul.f32 %v15, %v21
  %v24 = vld [vmem:[%s2] sm:$0x1]
  %v26 = vlaneseq
  %v27 = vshrl.u32 %v26, 7
  %v28 = vsub.s32 0, %v27
  %v29 = vrot.slane %v24, %v28
  %v31 = vadd.f32 %v23, %v29
  %v32 = vmax.f32 %v31, 0.0
  %v33 = vpack.c.bf16 %v32, %v32
  %34 = vst [vmem:[%s3] sm:$0xf] %v33
  // Predicated region
  $region14: #{resblk_forward.6} parent=0 // pred_check
    _
  $region15: #{resblk_forward.6} parent=0 // pred_check_branch
    %36 = sbr.rel (0) target = $region17
  $region16: #{resblk_forward.6} parent=0 // pred_region
    _
  $region17: #{resblk_forward.6} parent=0 // pred_fallthru
    _
  // Predicated region
  $region18: #{resblk_forward.6} parent=0 // pred_check
    _
  $region19: #{resblk_forward.6} parent=0 // pred_check_branch
    %38 = sbr.rel (0) target = $region21
  $region20: #{resblk_forward.6} parent=0 // pred_region
    _
  $region21: #{resblk_forward.6} parent=0 // pred_fallthru
    _

// kernel: resblk_forward.8
$region0: #{resblk_forward.8}
  #allocation0 [shape = 'u32[]', space=smem, size = 0x4, offset = 0x4, fixed_abs, tag = 'smem constant byte address 0x4 - core index']
  #allocation1 [shape = 'u32[144,128]{1,0:T(1,128)}', space=vmem, size = 0x12000, scoped, tag = 'internal scratch']
  #allocation2 [shape = 'f32[128,8]{1,0:T(8,128)}', space=vmem, size = 0x10000, scoped, tag = 'scratch operand']
  %s0 = inlined_call_operand.vmem [shape: bf16[128,4], index: 0, kind: input, shape index: {}]
  %s1 = inlined_call_operand.vmem [shape: bf16[4,8], index: 1, kind: input, shape index: {}]
  %s2 = inlined_call_operand.vmem [shape: bf16[128,8], index: 2, kind: output, shape index: {0}]
  %s3 = inlined_call_operand.vmem [shape: f32[1,1,8], index: 3, kind: output, shape index: {1}]
  %s4 = inlined_call_operand.vmem [shape: f32[1,1,8], index: 4, kind: output, shape index: {2}]
  %5 = xla_tuple %s2, %s3, %s4
  %s6 = sld [smem:[#allocation0]]
  $region42: #{resblk_forward.8} parent=0
    _
  %s8 = ssub.s32 1, %s6
  %s9 = scalar_select 0, %s8, %s6
  // Predicated region
  $region2: #{resblk_forward.8} parent=0 // pred_check
    _
  $region3: #{resblk_forward.8} parent=0 // pred_check_branch
    %11 = sbr.rel (0) target = $region5
  $region4: #{resblk_forward.8} parent=0 // pred_region
    _
  $region5: #{resblk_forward.8} parent=0 // pred_fallthru
    _
  // Predicated region
  $region6: #{resblk_forward.8} parent=0 // pred_check
    _
  $region7: #{resblk_forward.8} parent=0 // pred_check_branch
    %13 = sbr.rel (0) target = $region9
  $region8: #{resblk_forward.8} parent=0 // pred_region
    _
  $region9: #{resblk_forward.8} parent=0 // pred_fallthru
    _
  %p15 = scmp.eq.s32.totalorder 0, 0
  // Predicated region
  $region10: #{resblk_forward.8} parent=0 // pred_check
    %p16 = pneg %p15
  $region11: #{resblk_forward.8} parent=0 // pred_check_branch
    %18 = sbr.rel (%p16) target = $region13
  $region12: #{resblk_forward.8} parent=0 // pred_region
    %vm19 = vcmask 64512
    %20 = vst.msk [vmem:[#allocation2] sm:$0xff] %vm19, 0.0
    %21 = vst.msk [vmem:[#allocation2 + $0x8] sm:$0xff] %vm19, 0.0
    %22 = vst.msk [vmem:[#allocation2 + $0x10] sm:$0xff] %vm19, 0.0
    %23 = vst.msk [vmem:[#allocation2 + $0x18] sm:$0xff] %vm19, 0.0
    %24 = vst.msk [vmem:[#allocation2 + $0x20] sm:$0xff] %vm19, 0.0
    %25 = vst.msk [vmem:[#allocation2 + $0x28] sm:$0xff] %vm19, 0.0
    %26 = vst.msk [vmem:[#allocation2 + $0x30] sm:$0xff] %vm19, 0.0
    %27 = vst.msk [vmem:[#allocation2 + $0x38] sm:$0xff] %vm19, 0.0
    %28 = vst.msk [vmem:[#allocation2 + $0x40] sm:$0xff] %vm19, 0.0
    %29 = vst.msk [vmem:[#allocation2 + $0x48] sm:$0xff] %vm19, 0.0
    %30 = vst.msk [vmem:[#allocation2 + $0x50] sm:$0xff] %vm19, 0.0
    %31 = vst.msk [vmem:[#allocation2 + $0x58] sm:$0xff] %vm19, 0.0
    %32 = vst.msk [vmem:[#allocation2 + $0x60] sm:$0xff] %vm19, 0.0
    %33 = vst.msk [vmem:[#allocation2 + $0x68] sm:$0xff] %vm19, 0.0
    %34 = vst.msk [vmem:[#allocation2 + $0x70] sm:$0xff] %vm19, 0.0
    %35 = vst.msk [vmem:[#allocation2 + $0x78] sm:$0xff] %vm19, 0.0
  $region13: #{resblk_forward.8} parent=0 // pred_fallthru
    _
  %v36 = vld [vmem:[#allocation2] sm:$0xff]
  %v37 = vld [vmem:[#allocation2 + $0x8] sm:$0xff]
  %v38 = vld [vmem:[#allocation2 + $0x10] sm:$0xff]
  %v39 = vld [vmem:[#allocation2 + $0x18] sm:$0xff]
  %v40 = vld [vmem:[#allocation2 + $0x20] sm:$0xff]
  %v41 = vld [vmem:[#allocation2 + $0x28] sm:$0xff]
  %v42 = vld [vmem:[#allocation2 + $0x30] sm:$0xff]
  %v43 = vld [vmem:[#allocation2 + $0x38] sm:$0xff]
  %v44 = vld [vmem:[#allocation2 + $0x40] sm:$0xff]
  %v45 = vld [vmem:[#allocation2 + $0x48] sm:$0xff]
  %v46 = vld [vmem:[#allocation2 + $0x50] sm:$0xff]
  %v47 = vld [vmem:[#allocation2 + $0x58] sm:$0xff]
  %v48 = vld [vmem:[#allocation2 + $0x60] sm:$0xff]
  %v49 = vld [vmem:[#allocation2 + $0x68] sm:$0xff]
  %v50 = vld [vmem:[#allocation2 + $0x70] sm:$0xff]
  %v51 = vld [vmem:[#allocation2 + $0x78] sm:$0xff]
  %v52 = vld [vmem:[%s0] sm:$0xf]
  %v53 = vld [vmem:[%s0 + $0x4] sm:$0xf]
  %v54 = vld [vmem:[%s0 + $0x8] sm:$0xf]
  %v55 = vld [vmem:[%s0 + $0xc] sm:$0xf]
  %v56 = vld [vmem:[%s0 + $0x10] sm:$0xf]
  %v57 = vld [vmem:[%s0 + $0x14] sm:$0xf]
  %v58 = vld [vmem:[%s0 + $0x18] sm:$0xf]
  %v59 = vld [vmem:[%s0 + $0x1c] sm:$0xf]
  %v60 = vld [vmem:[%s0 + $0x20] sm:$0xf]
  %v61 = vld [vmem:[%s0 + $0x24] sm:$0xf]
  %v62 = vld [vmem:[%s0 + $0x28] sm:$0xf]
  %v63 = vld [vmem:[%s0 + $0x2c] sm:$0xf]
  %v64 = vld [vmem:[%s0 + $0x30] sm:$0xf]
  %v65 = vld [vmem:[%s0 + $0x34] sm:$0xf]
  %v66 = vld [vmem:[%s0 + $0x38] sm:$0xf]
  %v67 = vld [vmem:[%s0 + $0x3c] sm:$0xf]
  %v68 = vld [vmem:[%s1] sm:$0x3]
  %v85 = vunpack.c.l.b16 %v52
  %v86 = vunpack.c.l.b16 %v53
  %v87 = vunpack.c.l.b16 %v54
  %v88 = vunpack.c.l.b16 %v55
  %v89 = vunpack.c.l.b16 %v56
  %v90 = vunpack.c.l.b16 %v57
  %v91 = vunpack.c.l.b16 %v58
  %v92 = vunpack.c.l.b16 %v59
  %v93 = vunpack.c.l.b16 %v60
  %v94 = vunpack.c.l.b16 %v61
  %v95 = vunpack.c.l.b16 %v62
  %v96 = vunpack.c.l.b16 %v63
  %v97 = vunpack.c.l.b16 %v64
  %v98 = vunpack.c.l.b16 %v65
  %v99 = vunpack.c.l.b16 %v66
  %v100 = vunpack.c.l.b16 %v67
  %v101 = vpack.c.b16 %v86, %v85
  %v102 = vpack.c.b16 %v88, %v87
  %v103 = vpack.c.b16 %v90, %v89
  %v104 = vpack.c.b16 %v92, %v91
  %v105 = vpack.c.b16 %v94, %v93
  %v106 = vpack.c.b16 %v96, %v95
  %v107 = vpack.c.b16 %v98, %v97
  %v108 = vpack.c.b16 %v100, %v99
  %vm109 = vcmask 31744
  %v111 = vsel %vm109, %v101, 0
  %v114 = vsel %vm109, %v102, 0
  %v117 = vsel %vm109, %v103, 0
  %v120 = vsel %vm109, %v104, 0
  %v123 = vsel %vm109, %v105, 0
  %v126 = vsel %vm109, %v106, 0
  %v129 = vsel %vm109, %v107, 0
  %v132 = vsel %vm109, %v108, 0
  %vm134 = vcmask 1041408
  %v136 = vsel %vm134, %v68, 0
  %138 = vmatprep.subr.bf16.mxu0 0
  %139 = vmatpush1.bf16.msra.mxu0 %v136
  %140 = vmatprep.subr.bf16.mxu0 0
  %141 = vmatpush1.bf16.msra.mxu0 0
  %142 = vmatprep.subr.bf16.mxu0 0
  %143 = vmatpush1.bf16.msra.mxu0 0
  %144 = vmatprep.subr.bf16.mxu0 0
  %145 = vmatpush1.bf16.msra.mxu0 0
  %146 = vmatprep.subr.bf16.mxu0 0
  %147 = vmatpush1.bf16.msra.mxu0 0
  %148 = vmatprep.subr.bf16.mxu0 0
  %149 = vmatpush1.bf16.msra.mxu0 0
  %150 = vmatprep.subr.bf16.mxu0 0
  %151 = vmatpush1.bf16.msra.mxu0 0
  %152 = vmatprep.subr.bf16.mxu0 0
  %153 = vmatpush1.bf16.msra.mxu0 0
  %154 = vmatprep.subr.bf16.mxu0 0
  %155 = vmatpush1.bf16.msra.mxu0 0
  %156 = vmatprep.subr.bf16.mxu0 0
  %157 = vmatpush1.bf16.msra.mxu0 0
  %158 = vmatprep.subr.bf16.mxu0 0
  %159 = vmatpush1.bf16.msra.mxu0 0
  %160 = vmatprep.subr.bf16.mxu0 0
  %161 = vmatpush1.bf16.msra.mxu0 0
  %162 = vmatprep.subr.bf16.mxu0 0
  %163 = vmatpush1.bf16.msra.mxu0 0
  %164 = vmatprep.subr.bf16.mxu0 0
  %165 = vmatpush1.bf16.msra.mxu0 0
  %166 = vmatprep.subr.bf16.mxu0 0
  %167 = vmatpush1.bf16.msra.mxu0 0
  %168 = vmatprep.subr.bf16.mxu0 0
  %169 = vmatpush1.bf16.msra.mxu0 0
  %170 = vmatprep.mubr.bf16.mxu0 0
  %171 = vmatmul.mubr.bf16.gmra.mrb[0].mxu0 %v111
  %v172 = vpop.f32.mrb[0].mxu0
  %v173 = vadd.f32 0.0, %v172
  %v174 = vpop.f32.mrb[0].mxu0
  %v175 = vpop.f32.mrb[0].mxu0
  %v176 = vadd.f32 0.0, %v175
  %v177 = vpop.f32.mrb[0].mxu0
  %178 = vmatprep.mubr.bf16.mxu0 0
  %179 = vmatmul.mubr.bf16.gmra.mrb[0].mxu0 %v114
  %v180 = vpop.f32.mrb[0].mxu0
  %v181 = vadd.f32 0.0, %v180
  %v182 = vpop.f32.mrb[0].mxu0
  %v183 = vpop.f32.mrb[0].mxu0
  %v184 = vadd.f32 0.0, %v183
  %v185 = vpop.f32.mrb[0].mxu0
  %186 = vmatprep.mubr.bf16.mxu0 0
  %187 = vmatmul.mubr.bf16.gmra.mrb[0].mxu0 %v117
  %v188 = vpop.f32.mrb[0].mxu0
  %v189 = vadd.f32 0.0, %v188
  %v190 = vpop.f32.mrb[0].mxu0
  %v191 = vpop.f32.mrb[0].mxu0
  %v192 = vadd.f32 0.0, %v191
  %v193 = vpop.f32.mrb[0].mxu0
  %194 = vmatprep.mubr.bf16.mxu0 0
  %195 = vmatmul.mubr.bf16.gmra.mrb[0].mxu0 %v120
  %v196 = vpop.f32.mrb[0].mxu0
  %v197 = vadd.f32 0.0, %v196
  %v198 = vpop.f32.mrb[0].mxu0
  %v199 = vpop.f32.mrb[0].mxu0
  %v200 = vadd.f32 0.0, %v199
  %v201 = vpop.f32.mrb[0].mxu0
  %202 = vmatprep.mubr.bf16.mxu0 0
  %203 = vmatmul.mubr.bf16.gmra.mrb[0].mxu0 %v123
  %v204 = vpop.f32.mrb[0].mxu0
  %v205 = vadd.f32 0.0, %v204
  %v206 = vpop.f32.mrb[0].mxu0
  %v207 = vpop.f32.mrb[0].mxu0
  %v208 = vadd.f32 0.0, %v207
  %v209 = vpop.f32.mrb[0].mxu0
  %210 = vmatprep.mubr.bf16.mxu0 0
  %211 = vmatmul.mubr.bf16.gmra.mrb[0].mxu0 %v126
  %v212 = vpop.f32.mrb[0].mxu0
  %v213 = vadd.f32 0.0, %v212
  %v214 = vpop.f32.mrb[0].mxu0
  %v215 = vpop.f32.mrb[0].mxu0
  %v216 = vadd.f32 0.0, %v215
  %v217 = vpop.f32.mrb[0].mxu0
  %218 = vmatprep.mubr.bf16.mxu0 0
  %219 = vmatmul.mubr.bf16.gmra.mrb[0].mxu0 %v129
  %v220 = vpop.f32.mrb[0].mxu0
  %v221 = vadd.f32 0.0, %v220
  %v222 = vpop.f32.mrb[0].mxu0
  %v223 = vpop.f32.mrb[0].mxu0
  %v224 = vadd.f32 0.0, %v223
  %v225 = vpop.f32.mrb[0].mxu0
  %226 = vmatprep.mubr.bf16.mxu0 0
  %227 = vmatmul.mubr.bf16.gmra.mrb[0].mxu0 %v132
  %v228 = vpop.f32.mrb[0].mxu0
  %v229 = vadd.f32 0.0, %v228
  %v230 = vpop.f32.mrb[0].mxu0
  %v231 = vpop.f32.mrb[0].mxu0
  %v232 = vadd.f32 0.0, %v231
  %v233 = vpop.f32.mrb[0].mxu0
  %234 = vdwg.mxu0
  %v235 = vadd.f32 %v36, %v173
  %v236 = vadd.f32 %v37, %v176
  %v237 = vadd.f32 %v38, %v181
  %v238 = vadd.f32 %v39, %v184
  %v239 = vadd.f32 %v40, %v189
  %v240 = vadd.f32 %v41, %v192
  %v241 = vadd.f32 %v42, %v197
  %v242 = vadd.f32 %v43, %v200
  %v243 = vadd.f32 %v44, %v205
  %v244 = vadd.f32 %v45, %v208
  %v245 = vadd.f32 %v46, %v213
  %v246 = vadd.f32 %v47, %v216
  %v247 = vadd.f32 %v48, %v221
  %v248 = vadd.f32 %v49, %v224
  %v249 = vadd.f32 %v50, %v229
  %v250 = vadd.f32 %v51, %v232
  %vm251 = vcmask 64512
  %252 = vst.msk [vmem:[#allocation2] sm:$0xff] %vm251, %v235
  %253 = vst.msk [vmem:[#allocation2 + $0x8] sm:$0xff] %vm251, %v236
  %254 = vst.msk [vmem:[#allocation2 + $0x10] sm:$0xff] %vm251, %v237
  %255 = vst.msk [vmem:[#allocation2 + $0x18] sm:$0xff] %vm251, %v238
  %256 = vst.msk [vmem:[#allocation2 + $0x20] sm:$0xff] %vm251, %v239
  %257 = vst.msk [vmem:[#allocation2 + $0x28] sm:$0xff] %vm251, %v240
  %258 = vst.msk [vmem:[#allocation2 + $0x30] sm:$0xff] %vm251, %v241
  %259 = vst.msk [vmem:[#allocation2 + $0x38] sm:$0xff] %vm251, %v242
  %260 = vst.msk [vmem:[#allocation2 + $0x40] sm:$0xff] %vm251, %v243
  %261 = vst.msk [vmem:[#allocation2 + $0x48] sm:$0xff] %vm251, %v244
  %262 = vst.msk [vmem:[#allocation2 + $0x50] sm:$0xff] %vm251, %v245
  %263 = vst.msk [vmem:[#allocation2 + $0x58] sm:$0xff] %vm251, %v246
  %264 = vst.msk [vmem:[#allocation2 + $0x60] sm:$0xff] %vm251, %v247
  %265 = vst.msk [vmem:[#allocation2 + $0x68] sm:$0xff] %vm251, %v248
  %266 = vst.msk [vmem:[#allocation2 + $0x70] sm:$0xff] %vm251, %v249
  %267 = vst.msk [vmem:[#allocation2 + $0x78] sm:$0xff] %vm251, %v250
  // Predicated region
  $region14: #{resblk_forward.8} parent=0 // pred_check
    %p268 = pneg %p15
  $region15: #{resblk_forward.8} parent=0 // pred_check_branch
    %270 = sbr.rel (%p268) target = $region17
  $region16: #{resblk_forward.8} parent=0 // pred_region
    %v271 = vld [vmem:[#allocation2] sm:$0xff]
    %v272 = vld [vmem:[#allocation2 + $0x8] sm:$0xff]
    %v273 = vld [vmem:[#allocation2 + $0x10] sm:$0xff]
    %v274 = vld [vmem:[#allocation2 + $0x18] sm:$0xff]
    %v275 = vld [vmem:[#allocation2 + $0x20] sm:$0xff]
    %v276 = vld [vmem:[#allocation2 + $0x28] sm:$0xff]
    %v277 = vld [vmem:[#allocation2 + $0x30] sm:$0xff]
    %v278 = vld [vmem:[#allocation2 + $0x38] sm:$0xff]
    %v279 = vld [vmem:[#allocation2 + $0x40] sm:$0xff]
    %v280 = vld [vmem:[#allocation2 + $0x48] sm:$0xff]
    %v281 = vld [vmem:[#allocation2 + $0x50] sm:$0xff]
    %v282 = vld [vmem:[#allocation2 + $0x58] sm:$0xff]
    %v283 = vld [vmem:[#allocation2 + $0x60] sm:$0xff]
    %v284 = vld [vmem:[#allocation2 + $0x68] sm:$0xff]
    %v285 = vld [vmem:[#allocation2 + $0x70] sm:$0xff]
    %v286 = vld [vmem:[#allocation2 + $0x78] sm:$0xff]
    %v287 = vpack.c.bf16 %v272, %v271
    %v288 = vpack.c.bf16 %v274, %v273
    %v289 = vpack.c.bf16 %v276, %v275
    %v290 = vpack.c.bf16 %v278, %v277
    %v291 = vpack.c.bf16 %v280, %v279
    %v292 = vpack.c.bf16 %v282, %v281
    %v293 = vpack.c.bf16 %v284, %v283
    %v294 = vpack.c.bf16 %v286, %v285
    %v303 = vunpack.c.l.b16 %v287
    %v304 = vunpack.c.h.b16 %v287
    %v305 = vunpack.c.l.b16 %v288
    %v306 = vunpack.c.h.b16 %v288
    %v307 = vunpack.c.l.b16 %v289
    %v308 = vunpack.c.h.b16 %v289
    %v309 = vunpack.c.l.b16 %v290
    %v310 = vunpack.c.h.b16 %v290
    %v311 = vunpack.c.l.b16 %v291
    %v312 = vunpack.c.h.b16 %v291
    %v313 = vunpack.c.l.b16 %v292
    %v314 = vunpack.c.h.b16 %v292
    %v315 = vunpack.c.l.b16 %v293
    %v316 = vunpack.c.h.b16 %v293
    %v317 = vunpack.c.l.b16 %v294
    %v318 = vunpack.c.h.b16 %v294
    %v319 = vpack.c.b16 %v303, %v303
    %v320 = vpack.c.b16 %v304, %v304
    %v321 = vpack.c.b16 %v305, %v305
    %v322 = vpack.c.b16 %v306, %v306
    %v323 = vpack.c.b16 %v307, %v307
    %v324 = vpack.c.b16 %v308, %v308
    %v325 = vpack.c.b16 %v309, %v309
    %v326 = vpack.c.b16 %v310, %v310
    %v327 = vpack.c.b16 %v311, %v311
    %v328 = vpack.c.b16 %v312, %v312
    %v329 = vpack.c.b16 %v313, %v313
    %v330 = vpack.c.b16 %v314, %v314
    %v331 = vpack.c.b16 %v315, %v315
    %v332 = vpack.c.b16 %v316, %v316
    %v333 = vpack.c.b16 %v317, %v317
    %v334 = vpack.c.b16 %v318, %v318
    %vm351 = vcmask 60416
    %352 = vst.msk [vmem:[%s2] sm:$0xf] %vm351, %v319
    %353 = vst.msk [vmem:[%s2 + $0x4] sm:$0xf] %vm351, %v320
    %354 = vst.msk [vmem:[%s2 + $0x8] sm:$0xf] %vm351, %v321
    %355 = vst.msk [vmem:[%s2 + $0xc] sm:$0xf] %vm351, %v322
    %356 = vst.msk [vmem:[%s2 + $0x10] sm:$0xf] %vm351, %v323
    %357 = vst.msk [vmem:[%s2 + $0x14] sm:$0xf] %vm351, %v324
    %358 = vst.msk [vmem:[%s2 + $0x18] sm:$0xf] %vm351, %v325
    %359 = vst.msk [vmem:[%s2 + $0x1c] sm:$0xf] %vm351, %v326
    %360 = vst.msk [vmem:[%s2 + $0x20] sm:$0xf] %vm351, %v327
    %361 = vst.msk [vmem:[%s2 + $0x24] sm:$0xf] %vm351, %v328
    %362 = vst.msk [vmem:[%s2 + $0x28] sm:$0xf] %vm351, %v329
    %363 = vst.msk [vmem:[%s2 + $0x2c] sm:$0xf] %vm351, %v330
    %364 = vst.msk [vmem:[%s2 + $0x30] sm:$0xf] %vm351, %v331
    %365 = vst.msk [vmem:[%s2 + $0x34] sm:$0xf] %vm351, %v332
    %366 = vst.msk [vmem:[%s2 + $0x38] sm:$0xf] %vm351, %v333
    %367 = vst.msk [vmem:[%s2 + $0x3c] sm:$0xf] %vm351, %v334
    %v368 = vsel %vm251, %v271, 0.0
    %v369 = vsel %vm251, %v272, 0.0
    %v370 = vadd.f32 %v368, %v369
    %v371 = vsel %vm251, %v273, 0.0
    %v372 = vadd.f32 %v370, %v371
    %v373 = vsel %vm251, %v274, 0.0
    %v374 = vadd.f32 %v372, %v373
    %v375 = vsel %vm251, %v275, 0.0
    %v376 = vadd.f32 %v374, %v375
    %v377 = vsel %vm251, %v276, 0.0
    %v378 = vadd.f32 %v376, %v377
    %v379 = vsel %vm251, %v277, 0.0
    %v380 = vadd.f32 %v378, %v379
    %v381 = vsel %vm251, %v278, 0.0
    %v382 = vadd.f32 %v380, %v381
    %v383 = vsel %vm251, %v279, 0.0
    %v384 = vadd.f32 %v382, %v383
    %v385 = vsel %vm251, %v280, 0.0
    %v386 = vadd.f32 %v384, %v385
    %v387 = vsel %vm251, %v281, 0.0
    %v388 = vadd.f32 %v386, %v387
    %v389 = vsel %vm251, %v282, 0.0
    %v390 = vadd.f32 %v388, %v389
    %v391 = vsel %vm251, %v283, 0.0
    %v392 = vadd.f32 %v390, %v391
    %v393 = vsel %vm251, %v284, 0.0
    %v394 = vadd.f32 %v392, %v393
    %v395 = vsel %vm251, %v285, 0.0
    %v396 = vadd.f32 %v394, %v395
    %v397 = vsel %vm251, %v286, 0.0
    %v398 = vadd.f32 %v396, %v397
    %v399 = vrot.slane %v398, 4
    %v400 = vadd.f32 %v398, %v399
    %v401 = vrot.slane %v400, 2
    %v402 = vadd.f32 %v400, %v401
    %v403 = vrot.slane %v402, 1
    %v404 = vadd.f32 %v402, %v403
    %vm405 = vcmask 57344
    %406 = vst.msk [vmem:[%s3] sm:$0x1] %vm405, %v404
    %v407 = vmul.f32 %v271, %v271
    %v408 = vmul.f32 %v272, %v272
    %v409 = vmul.f32 %v273, %v273
    %v410 = vmul.f32 %v274, %v274
    %v411 = vmul.f32 %v275, %v275
    %v412 = vmul.f32 %v276, %v276
    %v413 = vmul.f32 %v277, %v277
    %v414 = vmul.f32 %v278, %v278
    %v415 = vmul.f32 %v279, %v279
    %v416 = vmul.f32 %v280, %v280
    %v417 = vmul.f32 %v281, %v281
    %v418 = vmul.f32 %v282, %v282
    %v419 = vmul.f32 %v283, %v283
    %v420 = vmul.f32 %v284, %v284
    %v421 = vmul.f32 %v285, %v285
    %v422 = vmul.f32 %v286, %v286
    %v423 = vsel %vm251, %v407, 0.0
    %v424 = vsel %vm251, %v408, 0.0
    %v425 = vadd.f32 %v423, %v424
    %v426 = vsel %vm251, %v409, 0.0
    %v427 = vadd.f32 %v425, %v426
    %v428 = vsel %vm251, %v410, 0.0
    %v429 = vadd.f32 %v427, %v428
    %v430 = vsel %vm251, %v411, 0.0
    %v431 = vadd.f32 %v429, %v430
    %v432 = vsel %vm251, %v412, 0.0
    %v433 = vadd.f32 %v431, %v432
    %v434 = vsel %vm251, %v413, 0.0
    %v435 = vadd.f32 %v433, %v434
    %v436 = vsel %vm251, %v414, 0.0
    %v437 = vadd.f32 %v435, %v436
    %v438 = vsel %vm251, %v415, 0.0
    %v439 = vadd.f32 %v437, %v438
    %v440 = vsel %vm251, %v416, 0.0
    %v441 = vadd.f32 %v439, %v440
    %v442 = vsel %vm251, %v417, 0.0
    %v443 = vadd.f32 %v441, %v442
    %v444 = vsel %vm251, %v418, 0.0
    %v445 = vadd.f32 %v443, %v444
    %v446 = vsel %vm251, %v419, 0.0
    %v447 = vadd.f32 %v445, %v446
    %v448 = vsel %vm251, %v420, 0.0
    %v449 = vadd.f32 %v447, %v448
    %v450 = vsel %vm251, %v421, 0.0
    %v451 = vadd.f32 %v449, %v450
    %v452 = vsel %vm251, %v422, 0.0
    %v453 = vadd.f32 %v451, %v452
    %v454 = vrot.slane %v453, 4
    %v455 = vadd.f32 %v453, %v454
    %v456 = vrot.slane %v455, 2
    %v457 = vadd.f32 %v455, %v456
    %v458 = vrot.slane %v457, 1
    %v459 = vadd.f32 %v457, %v458
    %460 = vst.msk [vmem:[%s4] sm:$0x1] %vm405, %v459
  $region17: #{resblk_forward.8} parent=0 // pred_fallthru
    _
  // Predicated region
  $region18: #{resblk_forward.8} parent=0 // pred_check
    _
  $region19: #{resblk_forward.8} parent=0 // pred_check_branch
    %462 = sbr.rel (0) target = $region21
  $region20: #{resblk_forward.8} parent=0 // pred_region
    _
  $region21: #{resblk_forward.8} parent=0 // pred_fallthru
    _
  // Predicated region
  $region22: #{resblk_forward.8} parent=0 // pred_check
    _
  $region23: #{resblk_forward.8} parent=0 // pred_check_branch
    %464 = sbr.rel (0) target = $region25
  $region24: #{resblk_forward.8} parent=0 // pred_region
    _
  $region25: #{resblk_forward.8} parent=0 // pred_fallthru
    _
  // Predicated region
  $region26: #{resblk_forward.8} parent=0 // pred_check
    _
  $region27: #{resblk_forward.8} parent=0 // pred_check_branch
    %466 = sbr.rel (0) target = $region29
  $region28: #{resblk_forward.8} parent=0 // pred_region
    _
  $region29: #{resblk_forward.8} parent=0 // pred_fallthru
    _
  // Predicated region
  $region30: #{resblk_forward.8} parent=0 // pred_check
    _
  $region31: #{resblk_forward.8} parent=0 // pred_check_branch
    %468 = sbr.rel (0) target = $region33
  $region32: #{resblk_forward.8} parent=0 // pred_region
    _
  $region33: #{resblk_forward.8} parent=0 // pred_fallthru
    _
  // Predicated region
  $region34: #{resblk_forward.8} parent=0 // pred_check
    _
  $region35: #{resblk_forward.8} parent=0 // pred_check_branch
    %470 = sbr.rel (0) target = $region37
  $region36: #{resblk_forward.8} parent=0 // pred_region
    _
  $region37: #{resblk_forward.8} parent=0 // pred_fallthru
    _
  // Predicated region
  $region38: #{resblk_forward.8} parent=0 // pred_check
    _
  $region39: #{resblk_forward.8} parent=0 // pred_check_branch
    %472 = sbr.rel (0) target = $region41
  $region40: #{resblk_forward.8} parent=0 // pred_region
    _
  $region41: #{resblk_forward.8} parent=0 // pred_fallthru
    _

// kernel: resblk_forward.5
$region0: #{resblk_forward.5}
  #allocation0 [shape = 'u32[]', space=smem, size = 0x4, offset = 0x4, fixed_abs, tag = 'smem constant byte address 0x4 - core index']
  #allocation1 [shape = 'u32[144,128]{1,0:T(1,128)}', space=vmem, size = 0x12000, scoped, tag = 'internal scratch']
  #allocation2 [shape = 'f32[128,8]{1,0:T(8,128)}', space=vmem, size = 0x10000, scoped, tag = 'scratch operand']
  %s0 = inlined_call_operand.vmem [shape: bf16[128,36], index: 0, kind: input, shape index: {}]
  %s1 = inlined_call_operand.vmem [shape: bf16[36,8], index: 1, kind: input, shape index: {}]
  %s2 = inlined_call_operand.vmem [shape: bf16[128,8], index: 2, kind: output, shape index: {0}]
  %s3 = inlined_call_operand.vmem [shape: f32[1,1,8], index: 3, kind: output, shape index: {1}]
  %s4 = inlined_call_operand.vmem [shape: f32[1,1,8], index: 4, kind: output, shape index: {2}]
  %5 = xla_tuple %s2, %s3, %s4
  %s6 = sld [smem:[#allocation0]]
  $region42: #{resblk_forward.5} parent=0
    _
  %s8 = ssub.s32 1, %s6
  %s9 = scalar_select 0, %s8, %s6
  // Predicated region
  $region2: #{resblk_forward.5} parent=0 // pred_check
    _
  $region3: #{resblk_forward.5} parent=0 // pred_check_branch
    %11 = sbr.rel (0) target = $region5
  $region4: #{resblk_forward.5} parent=0 // pred_region
    _
  $region5: #{resblk_forward.5} parent=0 // pred_fallthru
    _
  // Predicated region
  $region6: #{resblk_forward.5} parent=0 // pred_check
    _
  $region7: #{resblk_forward.5} parent=0 // pred_check_branch
    %13 = sbr.rel (0) target = $region9
  $region8: #{resblk_forward.5} parent=0 // pred_region
    _
  $region9: #{resblk_forward.5} parent=0 // pred_fallthru
    _
  %p15 = scmp.eq.s32.totalorder 0, 0
  // Predicated region
  $region10: #{resblk_forward.5} parent=0 // pred_check
    %p16 = pneg %p15
  $region11: #{resblk_forward.5} parent=0 // pred_check_branch
    %18 = sbr.rel (%p16) target = $region13
  $region12: #{resblk_forward.5} parent=0 // pred_region
    %vm19 = vcmask 64512
    %20 = vst.msk [vmem:[#allocation2] sm:$0xff] %vm19, 0.0
    %21 = vst.msk [vmem:[#allocation2 + $0x8] sm:$0xff] %vm19, 0.0
    %22 = vst.msk [vmem:[#allocation2 + $0x10] sm:$0xff] %vm19, 0.0
    %23 = vst.msk [vmem:[#allocation2 + $0x18] sm:$0xff] %vm19, 0.0
    %24 = vst.msk [vmem:[#allocation2 + $0x20] sm:$0xff] %vm19, 0.0
    %25 = vst.msk [vmem:[#allocation2 + $0x28] sm:$0xff] %vm19, 0.0
    %26 = vst.msk [vmem:[#allocation2 + $0x30] sm:$0xff] %vm19, 0.0
    %27 = vst.msk [vmem:[#allocation2 + $0x38] sm:$0xff] %vm19, 0.0
    %28 = vst.msk [vmem:[#allocation2 + $0x40] sm:$0xff] %vm19, 0.0
    %29 = vst.msk [vmem:[#allocation2 + $0x48] sm:$0xff] %vm19, 0.0
    %30 = vst.msk [vmem:[#allocation2 + $0x50] sm:$0xff] %vm19, 0.0
    %31 = vst.msk [vmem:[#allocation2 + $0x58] sm:$0xff] %vm19, 0.0
    %32 = vst.msk [vmem:[#allocation2 + $0x60] sm:$0xff] %vm19, 0.0
    %33 = vst.msk [vmem:[#allocation2 + $0x68] sm:$0xff] %vm19, 0.0
    %34 = vst.msk [vmem:[#allocation2 + $0x70] sm:$0xff] %vm19, 0.0
    %35 = vst.msk [vmem:[#allocation2 + $0x78] sm:$0xff] %vm19, 0.0
  $region13: #{resblk_forward.5} parent=0 // pred_fallthru
    _
  %v36 = vld [vmem:[#allocation2] sm:$0xff]
  %v37 = vld [vmem:[#allocation2 + $0x8] sm:$0xff]
  %v38 = vld [vmem:[#allocation2 + $0x10] sm:$0xff]
  %v39 = vld [vmem:[#allocation2 + $0x18] sm:$0xff]
  %v40 = vld [vmem:[#allocation2 + $0x20] sm:$0xff]
  %v41 = vld [vmem:[#allocation2 + $0x28] sm:$0xff]
  %v42 = vld [vmem:[#allocation2 + $0x30] sm:$0xff]
  %v43 = vld [vmem:[#allocation2 + $0x38] sm:$0xff]
  %v44 = vld [vmem:[#allocation2 + $0x40] sm:$0xff]
  %v45 = vld [vmem:[#allocation2 + $0x48] sm:$0xff]
  %v46 = vld [vmem:[#allocation2 + $0x50] sm:$0xff]
  %v47 = vld [vmem:[#allocation2 + $0x58] sm:$0xff]
  %v48 = vld [vmem:[#allocation2 + $0x60] sm:$0xff]
  %v49 = vld [vmem:[#allocation2 + $0x68] sm:$0xff]
  %v50 = vld [vmem:[#allocation2 + $0x70] sm:$0xff]
  %v51 = vld [vmem:[#allocation2 + $0x78] sm:$0xff]
  %v52 = vld [vmem:[%s0] sm:$0xf]
  %v53 = vld [vmem:[%s0 + $0x4] sm:$0xf]
  %v54 = vld [vmem:[%s0 + $0x8] sm:$0xf]
  %v55 = vld [vmem:[%s0 + $0xc] sm:$0xf]
  %v56 = vld [vmem:[%s0 + $0x10] sm:$0xf]
  %v57 = vld [vmem:[%s0 + $0x14] sm:$0xf]
  %v58 = vld [vmem:[%s0 + $0x18] sm:$0xf]
  %v59 = vld [vmem:[%s0 + $0x1c] sm:$0xf]
  %v60 = vld [vmem:[%s0 + $0x20] sm:$0xf]
  %v61 = vld [vmem:[%s0 + $0x24] sm:$0xf]
  %v62 = vld [vmem:[%s0 + $0x28] sm:$0xf]
  %v63 = vld [vmem:[%s0 + $0x2c] sm:$0xf]
  %v64 = vld [vmem:[%s0 + $0x30] sm:$0xf]
  %v65 = vld [vmem:[%s0 + $0x34] sm:$0xf]
  %v66 = vld [vmem:[%s0 + $0x38] sm:$0xf]
  %v67 = vld [vmem:[%s0 + $0x3c] sm:$0xf]
  %v68 = vld [vmem:[%s1] sm:$0xf]
  %v69 = vld [vmem:[%s1 + $0x4] sm:$0xf]
  %v70 = vld [vmem:[%s1 + $0x8] sm:$0xf]
  %v71 = vld [vmem:[%s1 + $0xc] sm:$0xf]
  %v72 = vld [vmem:[%s1 + $0x10] sm:$0x3]
  %v89 = vunpack.c.l.b16 %v52
  %v90 = vunpack.c.l.b16 %v53
  %v91 = vunpack.c.l.b16 %v54
  %v92 = vunpack.c.l.b16 %v55
  %v93 = vunpack.c.l.b16 %v56
  %v94 = vunpack.c.l.b16 %v57
  %v95 = vunpack.c.l.b16 %v58
  %v96 = vunpack.c.l.b16 %v59
  %v97 = vunpack.c.l.b16 %v60
  %v98 = vunpack.c.l.b16 %v61
  %v99 = vunpack.c.l.b16 %v62
  %v100 = vunpack.c.l.b16 %v63
  %v101 = vunpack.c.l.b16 %v64
  %v102 = vunpack.c.l.b16 %v65
  %v103 = vunpack.c.l.b16 %v66
  %v104 = vunpack.c.l.b16 %v67
  %v105 = vpack.c.b16 %v90, %v89
  %v106 = vpack.c.b16 %v92, %v91
  %v107 = vpack.c.b16 %v94, %v93
  %v108 = vpack.c.b16 %v96, %v95
  %v109 = vpack.c.b16 %v98, %v97
  %v110 = vpack.c.b16 %v100, %v99
  %v111 = vpack.c.b16 %v102, %v101
  %v112 = vpack.c.b16 %v104, %v103
  %v118 = vunpack.c.l.b16 %v68
  %v119 = vunpack.c.l.b16 %v69
  %v120 = vunpack.c.l.b16 %v70
  %v121 = vunpack.c.l.b16 %v71
  %v122 = vunpack.c.l.b16 %v72
  %v123 = vpack.c.b16 %v119, %v118
  %v124 = vpack.c.b16 %v121, %v120
  %v125 = vpack.c.b16 %v122, %v122
  %vm128 = vcmask 293888
  %v130 = vsel %vm128, %v105, 0
  %v133 = vsel %vm128, %v106, 0
  %v136 = vsel %vm128, %v107, 0
  %v139 = vsel %vm128, %v108, 0
  %v142 = vsel %vm128, %v109, 0
  %v145 = vsel %vm128, %v110, 0
  %v148 = vsel %vm128, %v111, 0
  %v151 = vsel %vm128, %v112, 0
  %vm153 = vcmask 1041408
  %v155 = vsel %vm153, %v125, 0
  %157 = vmatprep.subr.bf16.mxu0 0
  %158 = vmatpush1.bf16.msra.mxu0 %v123
  %159 = vmatprep.subr.bf16.mxu0 0
  %160 = vmatpush1.bf16.msra.mxu0 %v124
  %161 = vmatprep.subr.bf16.mxu0 0
  %162 = vmatpush1.bf16.msra.mxu0 %v155
  %163 = vmatprep.subr.bf16.mxu0 0
  %164 = vmatpush1.bf16.msra.mxu0 0
  %165 = vmatprep.subr.bf16.mxu0 0
  %166 = vmatpush1.bf16.msra.mxu0 0
  %167 = vmatprep.subr.bf16.mxu0 0
  %168 = vmatpush1.bf16.msra.mxu0 0
  %169 = vmatprep.subr.bf16.mxu0 0
  %170 = vmatpush1.bf16.msra.mxu0 0
  %171 = vmatprep.subr.bf16.mxu0 0
  %172 = vmatpush1.bf16.msra.mxu0 0
  %173 = vmatprep.subr.bf16.mxu0 0
  %174 = vmatpush1.bf16.msra.mxu0 0
  %175 = vmatprep.subr.bf16.mxu0 0
  %176 = vmatpush1.bf16.msra.mxu0 0
  %177 = vmatprep.subr.bf16.mxu0 0
  %178 = vmatpush1.bf16.msra.mxu0 0
  %179 = vmatprep.subr.bf16.mxu0 0
  %180 = vmatpush1.bf16.msra.mxu0 0
  %181 = vmatprep.subr.bf16.mxu0 0
  %182 = vmatpush1.bf16.msra.mxu0 0
  %183 = vmatprep.subr.bf16.mxu0 0
  %184 = vmatpush1.bf16.msra.mxu0 0
  %185 = vmatprep.subr.bf16.mxu0 0
  %186 = vmatpush1.bf16.msra.mxu0 0
  %187 = vmatprep.subr.bf16.mxu0 0
  %188 = vmatpush1.bf16.msra.mxu0 0
  %189 = vmatprep.mubr.bf16.mxu0 0
  %190 = vmatmul.mubr.bf16.gmra.mrb[0].mxu0 %v130
  %v191 = vpop.f32.mrb[0].mxu0
  %v192 = vadd.f32 0.0, %v191
  %v193 = vpop.f32.mrb[0].mxu0
  %v194 = vpop.f32.mrb[0].mxu0
  %v195 = vadd.f32 0.0, %v194
  %v196 = vpop.f32.mrb[0].mxu0
  %197 = vmatprep.mubr.bf16.mxu0 0
  %198 = vmatmul.mubr.bf16.gmra.mrb[0].mxu0 %v133
  %v199 = vpop.f32.mrb[0].mxu0
  %v200 = vadd.f32 0.0, %v199
  %v201 = vpop.f32.mrb[0].mxu0
  %v202 = vpop.f32.mrb[0].mxu0
  %v203 = vadd.f32 0.0, %v202
  %v204 = vpop.f32.mrb[0].mxu0
  %205 = vmatprep.mubr.bf16.mxu0 0
  %206 = vmatmul.mubr.bf16.gmra.mrb[0].mxu0 %v136
  %v207 = vpop.f32.mrb[0].mxu0
  %v208 = vadd.f32 0.0, %v207
  %v209 = vpop.f32.mrb[0].mxu0
  %v210 = vpop.f32.mrb[0].mxu0
  %v211 = vadd.f32 0.0, %v210
  %v212 = vpop.f32.mrb[0].mxu0
  %213 = vmatprep.mubr.bf16.mxu0 0
  %214 = vmatmul.mubr.bf16.gmra.mrb[0].mxu0 %v139
  %v215 = vpop.f32.mrb[0].mxu0
  %v216 = vadd.f32 0.0, %v215
  %v217 = vpop.f32.mrb[0].mxu0
  %v218 = vpop.f32.mrb[0].mxu0
  %v219 = vadd.f32 0.0, %v218
  %v220 = vpop.f32.mrb[0].mxu0
  %221 = vmatprep.mubr.bf16.mxu0 0
  %222 = vmatmul.mubr.bf16.gmra.mrb[0].mxu0 %v142
  %v223 = vpop.f32.mrb[0].mxu0
  %v224 = vadd.f32 0.0, %v223
  %v225 = vpop.f32.mrb[0].mxu0
  %v226 = vpop.f32.mrb[0].mxu0
  %v227 = vadd.f32 0.0, %v226
  %v228 = vpop.f32.mrb[0].mxu0
  %229 = vmatprep.mubr.bf16.mxu0 0
  %230 = vmatmul.mubr.bf16.gmra.mrb[0].mxu0 %v145
  %v231 = vpop.f32.mrb[0].mxu0
  %v232 = vadd.f32 0.0, %v231
  %v233 = vpop.f32.mrb[0].mxu0
  %v234 = vpop.f32.mrb[0].mxu0
  %v235 = vadd.f32 0.0, %v234
  %v236 = vpop.f32.mrb[0].mxu0
  %237 = vmatprep.mubr.bf16.mxu0 0
  %238 = vmatmul.mubr.bf16.gmra.mrb[0].mxu0 %v148
  %v239 = vpop.f32.mrb[0].mxu0
  %v240 = vadd.f32 0.0, %v239
  %v241 = vpop.f32.mrb[0].mxu0
  %v242 = vpop.f32.mrb[0].mxu0
  %v243 = vadd.f32 0.0, %v242
  %v244 = vpop.f32.mrb[0].mxu0
  %245 = vmatprep.mubr.bf16.mxu0 0
  %246 = vmatmul.mubr.bf16.gmra.mrb[0].mxu0 %v151
  %v247 = vpop.f32.mrb[0].mxu0
  %v248 = vadd.f32 0.0, %v247
  %v249 = vpop.f32.mrb[0].mxu0
  %v250 = vpop.f32.mrb[0].mxu0
  %v251 = vadd.f32 0.0, %v250
  %v252 = vpop.f32.mrb[0].mxu0
  %253 = vdwg.mxu0
  %v254 = vadd.f32 %v36, %v192
  %v255 = vadd.f32 %v37, %v195
  %v256 = vadd.f32 %v38, %v200
  %v257 = vadd.f32 %v39, %v203
  %v258 = vadd.f32 %v40, %v208
  %v259 = vadd.f32 %v41, %v211
  %v260 = vadd.f32 %v42, %v216
  %v261 = vadd.f32 %v43, %v219
  %v262 = vadd.f32 %v44, %v224
  %v263 = vadd.f32 %v45, %v227
  %v264 = vadd.f32 %v46, %v232
  %v265 = vadd.f32 %v47, %v235
  %v266 = vadd.f32 %v48, %v240
  %v267 = vadd.f32 %v49, %v243
  %v268 = vadd.f32 %v50, %v248
  %v269 = vadd.f32 %v51, %v251
  %vm270 = vcmask 64512
  %271 = vst.msk [vmem:[#allocation2] sm:$0xff] %vm270, %v254
  %272 = vst.msk [vmem:[#allocation2 + $0x8] sm:$0xff] %vm270, %v255
  %273 = vst.msk [vmem:[#allocation2 + $0x10] sm:$0xff] %vm270, %v256
  %274 = vst.msk [vmem:[#allocation2 + $0x18] sm:$0xff] %vm270, %v257
  %275 = vst.msk [vmem:[#allocation2 + $0x20] sm:$0xff] %vm270, %v258
  %276 = vst.msk [vmem:[#allocation2 + $0x28] sm:$0xff] %vm270, %v259
  %277 = vst.msk [vmem:[#allocation2 + $0x30] sm:$0xff] %vm270, %v260
  %278 = vst.msk [vmem:[#allocation2 + $0x38] sm:$0xff] %vm270, %v261
  %279 = vst.msk [vmem:[#allocation2 + $0x40] sm:$0xff] %vm270, %v262
  %280 = vst.msk [vmem:[#allocation2 + $0x48] sm:$0xff] %vm270, %v263
  %281 = vst.msk [vmem:[#allocation2 + $0x50] sm:$0xff] %vm270, %v264
  %282 = vst.msk [vmem:[#allocation2 + $0x58] sm:$0xff] %vm270, %v265
  %283 = vst.msk [vmem:[#allocation2 + $0x60] sm:$0xff] %vm270, %v266
  %284 = vst.msk [vmem:[#allocation2 + $0x68] sm:$0xff] %vm270, %v267
  %285 = vst.msk [vmem:[#allocation2 + $0x70] sm:$0xff] %vm270, %v268
  %286 = vst.msk [vmem:[#allocation2 + $0x78] sm:$0xff] %vm270, %v269
  // Predicated region
  $region14: #{resblk_forward.5} parent=0 // pred_check
    %p287 = pneg %p15
  $region15: #{resblk_forward.5} parent=0 // pred_check_branch
    %289 = sbr.rel (%p287) target = $region17
  $region16: #{resblk_forward.5} parent=0 // pred_region
    %v290 = vld [vmem:[#allocation2] sm:$0xff]
    %v291 = vld [vmem:[#allocation2 + $0x8] sm:$0xff]
    %v292 = vld [vmem:[#allocation2 + $0x10] sm:$0xff]
    %v293 = vld [vmem:[#allocation2 + $0x18] sm:$0xff]
    %v294 = vld [vmem:[#allocation2 + $0x20] sm:$0xff]
    %v295 = vld [vmem:[#allocation2 + $0x28] sm:$0xff]
    %v296 = vld [vmem:[#allocation2 + $0x30] sm:$0xff]
    %v297 = vld [vmem:[#allocation2 + $0x38] sm:$0xff]
    %v298 = vld [vmem:[#allocation2 + $0x40] sm:$0xff]
    %v299 = vld [vmem:[#allocation2 + $0x48] sm:$0xff]
    %v300 = vld [vmem:[#allocation2 + $0x50] sm:$0xff]
    %v301 = vld [vmem:[#allocation2 + $0x58] sm:$0xff]
    %v302 = vld [vmem:[#allocation2 + $0x60] sm:$0xff]
    %v303 = vld [vmem:[#allocation2 + $0x68] sm:$0xff]
    %v304 = vld [vmem:[#allocation2 + $0x70] sm:$0xff]
    %v305 = vld [vmem:[#allocation2 + $0x78] sm:$0xff]
    %v306 = vpack.c.bf16 %v291, %v290
    %v307 = vpack.c.bf16 %v293, %v292
    %v308 = vpack.c.bf16 %v295, %v294
    %v309 = vpack.c.bf16 %v297, %v296
    %v310 = vpack.c.bf16 %v299, %v298
    %v311 = vpack.c.bf16 %v301, %v300
    %v312 = vpack.c.bf16 %v303, %v302
    %v313 = vpack.c.bf16 %v305, %v304
    %v322 = vunpack.c.l.b16 %v306
    %v323 = vunpack.c.h.b16 %v306
    %v324 = vunpack.c.l.b16 %v307
    %v325 = vunpack.c.h.b16 %v307
    %v326 = vunpack.c.l.b16 %v308
    %v327 = vunpack.c.h.b16 %v308
    %v328 = vunpack.c.l.b16 %v309
    %v329 = vunpack.c.h.b16 %v309
    %v330 = vunpack.c.l.b16 %v310
    %v331 = vunpack.c.h.b16 %v310
    %v332 = vunpack.c.l.b16 %v311
    %v333 = vunpack.c.h.b16 %v311
    %v334 = vunpack.c.l.b16 %v312
    %v335 = vunpack.c.h.b16 %v312
    %v336 = vunpack.c.l.b16 %v313
    %v337 = vunpack.c.h.b16 %v313
    %v338 = vpack.c.b16 %v322, %v322
    %v339 = vpack.c.b16 %v323, %v323
    %v340 = vpack.c.b16 %v324, %v324
    %v341 = vpack.c.b16 %v325, %v325
    %v342 = vpack.c.b16 %v326, %v326
    %v343 = vpack.c.b16 %v327, %v327
    %v344 = vpack.c.b16 %v328, %v328
    %v345 = vpack.c.b16 %v329, %v329
    %v346 = vpack.c.b16 %v330, %v330
    %v347 = vpack.c.b16 %v331, %v331
    %v348 = vpack.c.b16 %v332, %v332
    %v349 = vpack.c.b16 %v333, %v333
    %v350 = vpack.c.b16 %v334, %v334
    %v351 = vpack.c.b16 %v335, %v335
    %v352 = vpack.c.b16 %v336, %v336
    %v353 = vpack.c.b16 %v337, %v337
    %vm370 = vcmask 60416
    %371 = vst.msk [vmem:[%s2] sm:$0xf] %vm370, %v338
    %372 = vst.msk [vmem:[%s2 + $0x4] sm:$0xf] %vm370, %v339
    %373 = vst.msk [vmem:[%s2 + $0x8] sm:$0xf] %vm370, %v340
    %374 = vst.msk [vmem:[%s2 + $0xc] sm:$0xf] %vm370, %v341
    %375 = vst.msk [vmem:[%s2 + $0x10] sm:$0xf] %vm370, %v342
    %376 = vst.msk [vmem:[%s2 + $0x14] sm:$0xf] %vm370, %v343
    %377 = vst.msk [vmem:[%s2 + $0x18] sm:$0xf] %vm370, %v344
    %378 = vst.msk [vmem:[%s2 + $0x1c] sm:$0xf] %vm370, %v345
    %379 = vst.msk [vmem:[%s2 + $0x20] sm:$0xf] %vm370, %v346
    %380 = vst.msk [vmem:[%s2 + $0x24] sm:$0xf] %vm370, %v347
    %381 = vst.msk [vmem:[%s2 + $0x28] sm:$0xf] %vm370, %v348
    %382 = vst.msk [vmem:[%s2 + $0x2c] sm:$0xf] %vm370, %v349
    %383 = vst.msk [vmem:[%s2 + $0x30] sm:$0xf] %vm370, %v350
    %384 = vst.msk [vmem:[%s2 + $0x34] sm:$0xf] %vm370, %v351
    %385 = vst.msk [vmem:[%s2 + $0x38] sm:$0xf] %vm370, %v352
    %386 = vst.msk [vmem:[%s2 + $0x3c] sm:$0xf] %vm370, %v353
    %v387 = vsel %vm270, %v290, 0.0
    %v388 = vsel %vm270, %v291, 0.0
    %v389 = vadd.f32 %v387, %v388
    %v390 = vsel %vm270, %v292, 0.0
    %v391 = vadd.f32 %v389, %v390
    %v392 = vsel %vm270, %v293, 0.0
    %v393 = vadd.f32 %v391, %v392
    %v394 = vsel %vm270, %v294, 0.0
    %v395 = vadd.f32 %v393, %v394
    %v396 = vsel %vm270, %v295, 0.0
    %v397 = vadd.f32 %v395, %v396
    %v398 = vsel %vm270, %v296, 0.0
    %v399 = vadd.f32 %v397, %v398
    %v400 = vsel %vm270, %v297, 0.0
    %v401 = vadd.f32 %v399, %v400
    %v402 = vsel %vm270, %v298, 0.0
    %v403 = vadd.f32 %v401, %v402
    %v404 = vsel %vm270, %v299, 0.0
    %v405 = vadd.f32 %v403, %v404
    %v406 = vsel %vm270, %v300, 0.0
    %v407 = vadd.f32 %v405, %v406
    %v408 = vsel %vm270, %v301, 0.0
    %v409 = vadd.f32 %v407, %v408
    %v410 = vsel %vm270, %v302, 0.0
    %v411 = vadd.f32 %v409, %v410
    %v412 = vsel %vm270, %v303, 0.0
    %v413 = vadd.f32 %v411, %v412
    %v414 = vsel %vm270, %v304, 0.0
    %v415 = vadd.f32 %v413, %v414
    %v416 = vsel %vm270, %v305, 0.0
    %v417 = vadd.f32 %v415, %v416
    %v418 = vrot.slane %v417, 4
    %v419 = vadd.f32 %v417, %v418
    %v420 = vrot.slane %v419, 2
    %v421 = vadd.f32 %v419, %v420
    %v422 = vrot.slane %v421, 1
    %v423 = vadd.f32 %v421, %v422
    %vm424 = vcmask 57344
    %425 = vst.msk [vmem:[%s3] sm:$0x1] %vm424, %v423
    %v426 = vmul.f32 %v290, %v290
    %v427 = vmul.f32 %v291, %v291
    %v428 = vmul.f32 %v292, %v292
    %v429 = vmul.f32 %v293, %v293
    %v430 = vmul.f32 %v294, %v294
    %v431 = vmul.f32 %v295, %v295
    %v432 = vmul.f32 %v296, %v296
    %v433 = vmul.f32 %v297, %v297
    %v434 = vmul.f32 %v298, %v298
    %v435 = vmul.f32 %v299, %v299
    %v436 = vmul.f32 %v300, %v300
    %v437 = vmul.f32 %v301, %v301
    %v438 = vmul.f32 %v302, %v302
    %v439 = vmul.f32 %v303, %v303
    %v440 = vmul.f32 %v304, %v304
    %v441 = vmul.f32 %v305, %v305
    %v442 = vsel %vm270, %v426, 0.0
    %v443 = vsel %vm270, %v427, 0.0
    %v444 = vadd.f32 %v442, %v443
    %v445 = vsel %vm270, %v428, 0.0
    %v446 = vadd.f32 %v444, %v445
    %v447 = vsel %vm270, %v429, 0.0
    %v448 = vadd.f32 %v446, %v447
    %v449 = vsel %vm270, %v430, 0.0
    %v450 = vadd.f32 %v448, %v449
    %v451 = vsel %vm270, %v431, 0.0
    %v452 = vadd.f32 %v450, %v451
    %v453 = vsel %vm270, %v432, 0.0
    %v454 = vadd.f32 %v452, %v453
    %v455 = vsel %vm270, %v433, 0.0
    %v456 = vadd.f32 %v454, %v455
    %v457 = vsel %vm270, %v434, 0.0
    %v458 = vadd.f32 %v456, %v457
    %v459 = vsel %vm270, %v435, 0.0
    %v460 = vadd.f32 %v458, %v459
    %v461 = vsel %vm270, %v436, 0.0
    %v462 = vadd.f32 %v460, %v461
    %v463 = vsel %vm270, %v437, 0.0
    %v464 = vadd.f32 %v462, %v463
    %v465 = vsel %vm270, %v438, 0.0
    %v466 = vadd.f32 %v464, %v465
    %v467 = vsel %vm270, %v439, 0.0
    %v468 = vadd.f32 %v466, %v467
    %v469 = vsel %vm270, %v440, 0.0
    %v470 = vadd.f32 %v468, %v469
    %v471 = vsel %vm270, %v441, 0.0
    %v472 = vadd.f32 %v470, %v471
    %v473 = vrot.slane %v472, 4
    %v474 = vadd.f32 %v472, %v473
    %v475 = vrot.slane %v474, 2
    %v476 = vadd.f32 %v474, %v475
    %v477 = vrot.slane %v476, 1
    %v478 = vadd.f32 %v476, %v477
    %479 = vst.msk [vmem:[%s4] sm:$0x1] %vm424, %v478
  $region17: #{resblk_forward.5} parent=0 // pred_fallthru
    _
  // Predicated region
  $region18: #{resblk_forward.5} parent=0 // pred_check
    _
  $region19: #{resblk_forward.5} parent=0 // pred_check_branch
    %481 = sbr.rel (0) target = $region21
  $region20: #{resblk_forward.5} parent=0 // pred_region
    _
  $region21: #{resblk_forward.5} parent=0 // pred_fallthru
    _
  // Predicated region
  $region22: #{resblk_forward.5} parent=0 // pred_check
    _
  $region23: #{resblk_forward.5} parent=0 // pred_check_branch
    %483 = sbr.rel (0) target = $region25
  $region24: #{resblk_forward.5} parent=0 // pred_region
    _
  $region25: #{resblk_forward.5} parent=0 // pred_fallthru
    _
  // Predicated region
  $region26: #{resblk_forward.5} parent=0 // pred_check
    _
  $region27: #{resblk_forward.5} parent=0 // pred_check_branch
    %485 = sbr.rel (0) target = $region29
  $region28: #{resblk_forward.5} parent=0 // pred_region
    _
  $region29: #{resblk_forward.5} parent=0 // pred_fallthru
    _
  // Predicated region
  $region30: #{resblk_forward.5} parent=0 // pred_check
    _
  $region31: #{resblk_forward.5} parent=0 // pred_check_branch
    %487 = sbr.rel (0) target = $region33
  $region32: #{resblk_forward.5} parent=0 // pred_region
    _
  $region33: #{resblk_forward.5} parent=0 // pred_fallthru
    _
  // Predicated region
  $region34: #{resblk_forward.5} parent=0 // pred_check
    _
  $region35: #{resblk_forward.5} parent=0 // pred_check_branch
    %489 = sbr.rel (0) target = $region37
  $region36: #{resblk_forward.5} parent=0 // pred_region
    _
  $region37: #{resblk_forward.5} parent=0 // pred_fallthru
    _
  // Predicated region
  $region38: #{resblk_forward.5} parent=0 // pred_check
    _
  $region39: #{resblk_forward.5} parent=0 // pred_check_branch
    %491 = sbr.rel (0) target = $region41
  $region40: #{resblk_forward.5} parent=0 // pred_region
    _
  $region41: #{resblk_forward.5} parent=0 // pred_fallthru
    _

// kernel: resblk_forward.9
$region0: #{resblk_forward.9}
  #allocation0 [shape = 'u32[]', space=smem, size = 0x4, offset = 0x4, fixed_abs, tag = 'smem constant byte address 0x4 - core index']
  #allocation1 [shape = 'u32[144,128]{1,0:T(1,128)}', space=vmem, size = 0x12000, scoped, tag = 'internal scratch']
  %s0 = inlined_call_operand.vmem [shape: bf16[8,128], index: 0, kind: input, shape index: {}]
  %s1 = inlined_call_operand.vmem [shape: f32[1,128], index: 1, kind: input, shape index: {}]
  %s2 = inlined_call_operand.vmem [shape: f32[1,128], index: 2, kind: input, shape index: {}]
  %s3 = inlined_call_operand.vmem [shape: bf16[8,128], index: 3, kind: input, shape index: {}]
  %s4 = inlined_call_operand.vmem [shape: f32[1,128], index: 4, kind: input, shape index: {}]
  %s5 = inlined_call_operand.vmem [shape: f32[1,128], index: 5, kind: input, shape index: {}]
  %s6 = inlined_call_operand.vmem [shape: f32[8,128], index: 6, kind: output, shape index: {}]
  %s7 = sld [smem:[#allocation0]]
  $region34: #{resblk_forward.9} parent=0
    _
  %s9 = ssub.s32 1, %s7
  %s10 = scalar_select 0, %s9, %s7
  // Predicated region
  $region2: #{resblk_forward.9} parent=0 // pred_check
    _
  $region3: #{resblk_forward.9} parent=0 // pred_check_branch
    %12 = sbr.rel (0) target = $region5
  $region4: #{resblk_forward.9} parent=0 // pred_region
    _
  $region5: #{resblk_forward.9} parent=0 // pred_fallthru
    _
  // Predicated region
  $region6: #{resblk_forward.9} parent=0 // pred_check
    _
  $region7: #{resblk_forward.9} parent=0 // pred_check_branch
    %14 = sbr.rel (0) target = $region9
  $region8: #{resblk_forward.9} parent=0 // pred_region
    _
  $region9: #{resblk_forward.9} parent=0 // pred_fallthru
    _
  // Predicated region
  $region10: #{resblk_forward.9} parent=0 // pred_check
    _
  $region11: #{resblk_forward.9} parent=0 // pred_check_branch
    %16 = sbr.rel (0) target = $region13
  $region12: #{resblk_forward.9} parent=0 // pred_region
    _
  $region13: #{resblk_forward.9} parent=0 // pred_fallthru
    _
  // Predicated region
  $region14: #{resblk_forward.9} parent=0 // pred_check
    _
  $region15: #{resblk_forward.9} parent=0 // pred_check_branch
    %18 = sbr.rel (0) target = $region17
  $region16: #{resblk_forward.9} parent=0 // pred_region
    _
  $region17: #{resblk_forward.9} parent=0 // pred_fallthru
    _
  // Predicated region
  $region18: #{resblk_forward.9} parent=0 // pred_check
    _
  $region19: #{resblk_forward.9} parent=0 // pred_check_branch
    %20 = sbr.rel (0) target = $region21
  $region20: #{resblk_forward.9} parent=0 // pred_region
    _
  $region21: #{resblk_forward.9} parent=0 // pred_fallthru
    _
  // Predicated region
  $region22: #{resblk_forward.9} parent=0 // pred_check
    _
  $region23: #{resblk_forward.9} parent=0 // pred_check_branch
    %22 = sbr.rel (0) target = $region25
  $region24: #{resblk_forward.9} parent=0 // pred_region
    _
  $region25: #{resblk_forward.9} parent=0 // pred_fallthru
    _
  %v23 = vld [vmem:[%s0] sm:$0xf]
  %v24 = vunpack.c.l.bf16 %v23
  %v25 = vld [vmem:[%s1] sm:$0x1]
  %v27 = vlaneseq
  %v28 = vshrl.u32 %v27, 7
  %v29 = vsub.s32 0, %v28
  %v30 = vrot.slane %v25, %v29
  %v32 = vmul.f32 %v24, %v30
  %v33 = vld [vmem:[%s2] sm:$0x1]
  %v35 = vlaneseq
  %v36 = vshrl.u32 %v35, 7
  %v37 = vsub.s32 0, %v36
  %v38 = vrot.slane %v33, %v37
  %v40 = vadd.f32 %v32, %v38
  %v41 = vld [vmem:[%s3] sm:$0xf]
  %v42 = vunpack.c.l.bf16 %v41
  %v43 = vld [vmem:[%s4] sm:$0x1]
  %v45 = vlaneseq
  %v46 = vshrl.u32 %v45, 7
  %v47 = vsub.s32 0, %v46
  %v48 = vrot.slane %v43, %v47
  %v50 = vmul.f32 %v42, %v48
  %v51 = vld [vmem:[%s5] sm:$0x1]
  %v53 = vlaneseq
  %v54 = vshrl.u32 %v53, 7
  %v55 = vsub.s32 0, %v54
  %v56 = vrot.slane %v51, %v55
  %v58 = vadd.f32 %v50, %v56
  %v59 = vadd.f32 %v40, %v58
  %60 = vst [vmem:[%s6] sm:$0xff] %v59
  // Predicated region
  $region26: #{resblk_forward.9} parent=0 // pred_check
    _
  $region27: #{resblk_forward.9} parent=0 // pred_check_branch
    %62 = sbr.rel (0) target = $region29
  $region28: #{resblk_forward.9} parent=0 // pred_region
    _
  $region29: #{resblk_forward.9} parent=0 // pred_fallthru
    _
  // Predicated region
  $region30: #{resblk_forward.9} parent=0 // pred_check
    _
  $region31: #{resblk_forward.9} parent=0 // pred_check_branch
    %64 = sbr.rel (0) target = $region33
  $region32: #{resblk_forward.9} parent=0 // pred_region
    _
  $region33: #{resblk_forward.9} parent=0 // pred_fallthru
    _

// kernel: resblk_forward.7
$region0: #{resblk_forward.7}
  #allocation0 [shape = 'u32[]', space=smem, size = 0x4, offset = 0x4, fixed_abs, tag = 'smem constant byte address 0x4 - core index']
  #allocation1 [shape = 'u32[144,128]{1,0:T(1,128)}', space=vmem, size = 0x12000, scoped, tag = 'internal scratch']
  #allocation2 [shape = 'f32[128,8]{1,0:T(8,128)}', space=vmem, size = 0x10000, scoped, tag = 'scratch operand']
  %s0 = inlined_call_operand.vmem [shape: bf16[128,72], index: 0, kind: input, shape index: {}]
  %s1 = inlined_call_operand.vmem [shape: bf16[72,8], index: 1, kind: input, shape index: {}]
  %s2 = inlined_call_operand.vmem [shape: bf16[128,8], index: 2, kind: output, shape index: {0}]
  %s3 = inlined_call_operand.vmem [shape: f32[1,1,8], index: 3, kind: output, shape index: {1}]
  %s4 = inlined_call_operand.vmem [shape: f32[1,1,8], index: 4, kind: output, shape index: {2}]
  %5 = xla_tuple %s2, %s3, %s4
  %s6 = sld [smem:[#allocation0]]
  $region42: #{resblk_forward.7} parent=0
    _
  %s8 = ssub.s32 1, %s6
  %s9 = scalar_select 0, %s8, %s6
  // Predicated region
  $region2: #{resblk_forward.7} parent=0 // pred_check
    _
  $region3: #{resblk_forward.7} parent=0 // pred_check_branch
    %11 = sbr.rel (0) target = $region5
  $region4: #{resblk_forward.7} parent=0 // pred_region
    _
  $region5: #{resblk_forward.7} parent=0 // pred_fallthru
    _
  // Predicated region
  $region6: #{resblk_forward.7} parent=0 // pred_check
    _
  $region7: #{resblk_forward.7} parent=0 // pred_check_branch
    %13 = sbr.rel (0) target = $region9
  $region8: #{resblk_forward.7} parent=0 // pred_region
    _
  $region9: #{resblk_forward.7} parent=0 // pred_fallthru
    _
  %p15 = scmp.eq.s32.totalorder 0, 0
  // Predicated region
  $region10: #{resblk_forward.7} parent=0 // pred_check
    %p16 = pneg %p15
  $region11: #{resblk_forward.7} parent=0 // pred_check_branch
    %18 = sbr.rel (%p16) target = $region13
  $region12: #{resblk_forward.7} parent=0 // pred_region
    %vm19 = vcmask 64512
    %20 = vst.msk [vmem:[#allocation2] sm:$0xff] %vm19, 0.0
    %21 = vst.msk [vmem:[#allocation2 + $0x8] sm:$0xff] %vm19, 0.0
    %22 = vst.msk [vmem:[#allocation2 + $0x10] sm:$0xff] %vm19, 0.0
    %23 = vst.msk [vmem:[#allocation2 + $0x18] sm:$0xff] %vm19, 0.0
    %24 = vst.msk [vmem:[#allocation2 + $0x20] sm:$0xff] %vm19, 0.0
    %25 = vst.msk [vmem:[#allocation2 + $0x28] sm:$0xff] %vm19, 0.0
    %26 = vst.msk [vmem:[#allocation2 + $0x30] sm:$0xff] %vm19, 0.0
    %27 = vst.msk [vmem:[#allocation2 + $0x38] sm:$0xff] %vm19, 0.0
    %28 = vst.msk [vmem:[#allocation2 + $0x40] sm:$0xff] %vm19, 0.0
    %29 = vst.msk [vmem:[#allocation2 + $0x48] sm:$0xff] %vm19, 0.0
    %30 = vst.msk [vmem:[#allocation2 + $0x50] sm:$0xff] %vm19, 0.0
    %31 = vst.msk [vmem:[#allocation2 + $0x58] sm:$0xff] %vm19, 0.0
    %32 = vst.msk [vmem:[#allocation2 + $0x60] sm:$0xff] %vm19, 0.0
    %33 = vst.msk [vmem:[#allocation2 + $0x68] sm:$0xff] %vm19, 0.0
    %34 = vst.msk [vmem:[#allocation2 + $0x70] sm:$0xff] %vm19, 0.0
    %35 = vst.msk [vmem:[#allocation2 + $0x78] sm:$0xff] %vm19, 0.0
  $region13: #{resblk_forward.7} parent=0 // pred_fallthru
    _
  %v36 = vld [vmem:[#allocation2] sm:$0xff]
  %v37 = vld [vmem:[#allocation2 + $0x8] sm:$0xff]
  %v38 = vld [vmem:[#allocation2 + $0x10] sm:$0xff]
  %v39 = vld [vmem:[#allocation2 + $0x18] sm:$0xff]
  %v40 = vld [vmem:[#allocation2 + $0x20] sm:$0xff]
  %v41 = vld [vmem:[#allocation2 + $0x28] sm:$0xff]
  %v42 = vld [vmem:[#allocation2 + $0x30] sm:$0xff]
  %v43 = vld [vmem:[#allocation2 + $0x38] sm:$0xff]
  %v44 = vld [vmem:[#allocation2 + $0x40] sm:$0xff]
  %v45 = vld [vmem:[#allocation2 + $0x48] sm:$0xff]
  %v46 = vld [vmem:[#allocation2 + $0x50] sm:$0xff]
  %v47 = vld [vmem:[#allocation2 + $0x58] sm:$0xff]
  %v48 = vld [vmem:[#allocation2 + $0x60] sm:$0xff]
  %v49 = vld [vmem:[#allocation2 + $0x68] sm:$0xff]
  %v50 = vld [vmem:[#allocation2 + $0x70] sm:$0xff]
  %v51 = vld [vmem:[#allocation2 + $0x78] sm:$0xff]
  %v52 = vld [vmem:[%s0] sm:$0xf]
  %v53 = vld [vmem:[%s0 + $0x4] sm:$0xf]
  %v54 = vld [vmem:[%s0 + $0x8] sm:$0xf]
  %v55 = vld [vmem:[%s0 + $0xc] sm:$0xf]
  %v56 = vld [vmem:[%s0 + $0x10] sm:$0xf]
  %v57 = vld [vmem:[%s0 + $0x14] sm:$0xf]
  %v58 = vld [vmem:[%s0 + $0x18] sm:$0xf]
  %v59 = vld [vmem:[%s0 + $0x1c] sm:$0xf]
  %v60 = vld [vmem:[%s0 + $0x20] sm:$0xf]
  %v61 = vld [vmem:[%s0 + $0x24] sm:$0xf]
  %v62 = vld [vmem:[%s0 + $0x28] sm:$0xf]
  %v63 = vld [vmem:[%s0 + $0x2c] sm:$0xf]
  %v64 = vld [vmem:[%s0 + $0x30] sm:$0xf]
  %v65 = vld [vmem:[%s0 + $0x34] sm:$0xf]
  %v66 = vld [vmem:[%s0 + $0x38] sm:$0xf]
  %v67 = vld [vmem:[%s0 + $0x3c] sm:$0xf]
  %v68 = vld [vmem:[%s1] sm:$0xf]
  %v69 = vld [vmem:[%s1 + $0x4] sm:$0xf]
  %v70 = vld [vmem:[%s1 + $0x8] sm:$0xf]
  %v71 = vld [vmem:[%s1 + $0xc] sm:$0xf]
  %v72 = vld [vmem:[%s1 + $0x10] sm:$0xf]
  %v73 = vld [vmem:[%s1 + $0x14] sm:$0xf]
  %v74 = vld [vmem:[%s1 + $0x18] sm:$0xf]
  %v75 = vld [vmem:[%s1 + $0x1c] sm:$0xf]
  %v76 = vld [vmem:[%s1 + $0x20] sm:$0xf]
  %v93 = vunpack.c.l.b16 %v52
  %v94 = vunpack.c.l.b16 %v53
  %v95 = vunpack.c.l.b16 %v54
  %v96 = vunpack.c.l.b16 %v55
  %v97 = vunpack.c.l.b16 %v56
  %v98 = vunpack.c.l.b16 %v57
  %v99 = vunpack.c.l.b16 %v58
  %v100 = vunpack.c.l.b16 %v59
  %v101 = vunpack.c.l.b16 %v60
  %v102 = vunpack.c.l.b16 %v61
  %v103 = vunpack.c.l.b16 %v62
  %v104 = vunpack.c.l.b16 %v63
  %v105 = vunpack.c.l.b16 %v64
  %v106 = vunpack.c.l.b16 %v65
  %v107 = vunpack.c.l.b16 %v66
  %v108 = vunpack.c.l.b16 %v67
  %v109 = vpack.c.b16 %v94, %v93
  %v110 = vpack.c.b16 %v96, %v95
  %v111 = vpack.c.b16 %v98, %v97
  %v112 = vpack.c.b16 %v100, %v99
  %v113 = vpack.c.b16 %v102, %v101
  %v114 = vpack.c.b16 %v104, %v103
  %v115 = vpack.c.b16 %v106, %v105
  %v116 = vpack.c.b16 %v108, %v107
  %v126 = vunpack.c.l.b16 %v68
  %v127 = vunpack.c.l.b16 %v69
  %v128 = vunpack.c.l.b16 %v70
  %v129 = vunpack.c.l.b16 %v71
  %v130 = vunpack.c.l.b16 %v72
  %v131 = vunpack.c.l.b16 %v73
  %v132 = vunpack.c.l.b16 %v74
  %v133 = vunpack.c.l.b16 %v75
  %v134 = vunpack.c.l.b16 %v76
  %v135 = vpack.c.b16 %v127, %v126
  %v136 = vpack.c.b16 %v129, %v128
  %v137 = vpack.c.b16 %v131, %v130
  %v138 = vpack.c.b16 %v133, %v132
  %v139 = vpack.c.b16 %v134, %v134
  %vm144 = vcmask 588800
  %v146 = vsel %vm144, %v109, 0
  %v149 = vsel %vm144, %v110, 0
  %v152 = vsel %vm144, %v111, 0
  %v155 = vsel %vm144, %v112, 0
  %v158 = vsel %vm144, %v113, 0
  %v161 = vsel %vm144, %v114, 0
  %v164 = vsel %vm144, %v115, 0
  %v167 = vsel %vm144, %v116, 0
  %vm169 = vcmask 1043456
  %v171 = vsel %vm169, %v139, 0
  %173 = vmatprep.subr.bf16.mxu0 0
  %174 = vmatpush1.bf16.msra.mxu0 %v135
  %175 = vmatprep.subr.bf16.mxu0 0
  %176 = vmatpush1.bf16.msra.mxu0 %v136
  %177 = vmatprep.subr.bf16.mxu0 0
  %178 = vmatpush1.bf16.msra.mxu0 %v137
  %179 = vmatprep.subr.bf16.mxu0 0
  %180 = vmatpush1.bf16.msra.mxu0 %v138
  %181 = vmatprep.subr.bf16.mxu0 0
  %182 = vmatpush1.bf16.msra.mxu0 %v171
  %183 = vmatprep.subr.bf16.mxu0 0
  %184 = vmatpush1.bf16.msra.mxu0 0
  %185 = vmatprep.subr.bf16.mxu0 0
  %186 = vmatpush1.bf16.msra.mxu0 0
  %187 = vmatprep.subr.bf16.mxu0 0
  %188 = vmatpush1.bf16.msra.mxu0 0
  %189 = vmatprep.subr.bf16.mxu0 0
  %190 = vmatpush1.bf16.msra.mxu0 0
  %191 = vmatprep.subr.bf16.mxu0 0
  %192 = vmatpush1.bf16.msra.mxu0 0
  %193 = vmatprep.subr.bf16.mxu0 0
  %194 = vmatpush1.bf16.msra.mxu0 0
  %195 = vmatprep.subr.bf16.mxu0 0
  %196 = vmatpush1.bf16.msra.mxu0 0
  %197 = vmatprep.subr.bf16.mxu0 0
  %198 = vmatpush1.bf16.msra.mxu0 0
  %199 = vmatprep.subr.bf16.mxu0 0
  %200 = vmatpush1.bf16.msra.mxu0 0
  %201 = vmatprep.subr.bf16.mxu0 0
  %202 = vmatpush1.bf16.msra.mxu0 0
  %203 = vmatprep.subr.bf16.mxu0 0
  %204 = vmatpush1.bf16.msra.mxu0 0
  %205 = vmatprep.mubr.bf16.mxu0 0
  %206 = vmatmul.mubr.bf16.gmra.mrb[0].mxu0 %v146
  %v207 = vpop.f32.mrb[0].mxu0
  %v208 = vadd.f32 0.0, %v207
  %v209 = vpop.f32.mrb[0].mxu0
  %v210 = vpop.f32.mrb[0].mxu0
  %v211 = vadd.f32 0.0, %v210
  %v212 = vpop.f32.mrb[0].mxu0
  %213 = vmatprep.mubr.bf16.mxu0 0
  %214 = vmatmul.mubr.bf16.gmra.mrb[0].mxu0 %v149
  %v215 = vpop.f32.mrb[0].mxu0
  %v216 = vadd.f32 0.0, %v215
  %v217 = vpop.f32.mrb[0].mxu0
  %v218 = vpop.f32.mrb[0].mxu0
  %v219 = vadd.f32 0.0, %v218
  %v220 = vpop.f32.mrb[0].mxu0
  %221 = vmatprep.mubr.bf16.mxu0 0
  %222 = vmatmul.mubr.bf16.gmra.mrb[0].mxu0 %v152
  %v223 = vpop.f32.mrb[0].mxu0
  %v224 = vadd.f32 0.0, %v223
  %v225 = vpop.f32.mrb[0].mxu0
  %v226 = vpop.f32.mrb[0].mxu0
  %v227 = vadd.f32 0.0, %v226
  %v228 = vpop.f32.mrb[0].mxu0
  %229 = vmatprep.mubr.bf16.mxu0 0
  %230 = vmatmul.mubr.bf16.gmra.mrb[0].mxu0 %v155
  %v231 = vpop.f32.mrb[0].mxu0
  %v232 = vadd.f32 0.0, %v231
  %v233 = vpop.f32.mrb[0].mxu0
  %v234 = vpop.f32.mrb[0].mxu0
  %v235 = vadd.f32 0.0, %v234
  %v236 = vpop.f32.mrb[0].mxu0
  %237 = vmatprep.mubr.bf16.mxu0 0
  %238 = vmatmul.mubr.bf16.gmra.mrb[0].mxu0 %v158
  %v239 = vpop.f32.mrb[0].mxu0
  %v240 = vadd.f32 0.0, %v239
  %v241 = vpop.f32.mrb[0].mxu0
  %v242 = vpop.f32.mrb[0].mxu0
  %v243 = vadd.f32 0.0, %v242
  %v244 = vpop.f32.mrb[0].mxu0
  %245 = vmatprep.mubr.bf16.mxu0 0
  %246 = vmatmul.mubr.bf16.gmra.mrb[0].mxu0 %v161
  %v247 = vpop.f32.mrb[0].mxu0
  %v248 = vadd.f32 0.0, %v247
  %v249 = vpop.f32.mrb[0].mxu0
  %v250 = vpop.f32.mrb[0].mxu0
  %v251 = vadd.f32 0.0, %v250
  %v252 = vpop.f32.mrb[0].mxu0
  %253 = vmatprep.mubr.bf16.mxu0 0
  %254 = vmatmul.mubr.bf16.gmra.mrb[0].mxu0 %v164
  %v255 = vpop.f32.mrb[0].mxu0
  %v256 = vadd.f32 0.0, %v255
  %v257 = vpop.f32.mrb[0].mxu0
  %v258 = vpop.f32.mrb[0].mxu0
  %v259 = vadd.f32 0.0, %v258
  %v260 = vpop.f32.mrb[0].mxu0
  %261 = vmatprep.mubr.bf16.mxu0 0
  %262 = vmatmul.mubr.bf16.gmra.mrb[0].mxu0 %v167
  %v263 = vpop.f32.mrb[0].mxu0
  %v264 = vadd.f32 0.0, %v263
  %v265 = vpop.f32.mrb[0].mxu0
  %v266 = vpop.f32.mrb[0].mxu0
  %v267 = vadd.f32 0.0, %v266
  %v268 = vpop.f32.mrb[0].mxu0
  %269 = vdwg.mxu0
  %v270 = vadd.f32 %v36, %v208
  %v271 = vadd.f32 %v37, %v211
  %v272 = vadd.f32 %v38, %v216
  %v273 = vadd.f32 %v39, %v219
  %v274 = vadd.f32 %v40, %v224
  %v275 = vadd.f32 %v41, %v227
  %v276 = vadd.f32 %v42, %v232
  %v277 = vadd.f32 %v43, %v235
  %v278 = vadd.f32 %v44, %v240
  %v279 = vadd.f32 %v45, %v243
  %v280 = vadd.f32 %v46, %v248
  %v281 = vadd.f32 %v47, %v251
  %v282 = vadd.f32 %v48, %v256
  %v283 = vadd.f32 %v49, %v259
  %v284 = vadd.f32 %v50, %v264
  %v285 = vadd.f32 %v51, %v267
  %vm286 = vcmask 64512
  %287 = vst.msk [vmem:[#allocation2] sm:$0xff] %vm286, %v270
  %288 = vst.msk [vmem:[#allocation2 + $0x8] sm:$0xff] %vm286, %v271
  %289 = vst.msk [vmem:[#allocation2 + $0x10] sm:$0xff] %vm286, %v272
  %290 = vst.msk [vmem:[#allocation2 + $0x18] sm:$0xff] %vm286, %v273
  %291 = vst.msk [vmem:[#allocation2 + $0x20] sm:$0xff] %vm286, %v274
  %292 = vst.msk [vmem:[#allocation2 + $0x28] sm:$0xff] %vm286, %v275
  %293 = vst.msk [vmem:[#allocation2 + $0x30] sm:$0xff] %vm286, %v276
  %294 = vst.msk [vmem:[#allocation2 + $0x38] sm:$0xff] %vm286, %v277
  %295 = vst.msk [vmem:[#allocation2 + $0x40] sm:$0xff] %vm286, %v278
  %296 = vst.msk [vmem:[#allocation2 + $0x48] sm:$0xff] %vm286, %v279
  %297 = vst.msk [vmem:[#allocation2 + $0x50] sm:$0xff] %vm286, %v280
  %298 = vst.msk [vmem:[#allocation2 + $0x58] sm:$0xff] %vm286, %v281
  %299 = vst.msk [vmem:[#allocation2 + $0x60] sm:$0xff] %vm286, %v282
  %300 = vst.msk [vmem:[#allocation2 + $0x68] sm:$0xff] %vm286, %v283
  %301 = vst.msk [vmem:[#allocation2 + $0x70] sm:$0xff] %vm286, %v284
  %302 = vst.msk [vmem:[#allocation2 + $0x78] sm:$0xff] %vm286, %v285
  // Predicated region
  $region14: #{resblk_forward.7} parent=0 // pred_check
    %p303 = pneg %p15
  $region15: #{resblk_forward.7} parent=0 // pred_check_branch
    %305 = sbr.rel (%p303) target = $region17
  $region16: #{resblk_forward.7} parent=0 // pred_region
    %v306 = vld [vmem:[#allocation2] sm:$0xff]
    %v307 = vld [vmem:[#allocation2 + $0x8] sm:$0xff]
    %v308 = vld [vmem:[#allocation2 + $0x10] sm:$0xff]
    %v309 = vld [vmem:[#allocation2 + $0x18] sm:$0xff]
    %v310 = vld [vmem:[#allocation2 + $0x20] sm:$0xff]
    %v311 = vld [vmem:[#allocation2 + $0x28] sm:$0xff]
    %v312 = vld [vmem:[#allocation2 + $0x30] sm:$0xff]
    %v313 = vld [vmem:[#allocation2 + $0x38] sm:$0xff]
    %v314 = vld [vmem:[#allocation2 + $0x40] sm:$0xff]
    %v315 = vld [vmem:[#allocation2 + $0x48] sm:$0xff]
    %v316 = vld [vmem:[#allocation2 + $0x50] sm:$0xff]
    %v317 = vld [vmem:[#allocation2 + $0x58] sm:$0xff]
    %v318 = vld [vmem:[#allocation2 + $0x60] sm:$0xff]
    %v319 = vld [vmem:[#allocation2 + $0x68] sm:$0xff]
    %v320 = vld [vmem:[#allocation2 + $0x70] sm:$0xff]
    %v321 = vld [vmem:[#allocation2 + $0x78] sm:$0xff]
    %v322 = vpack.c.bf16 %v307, %v306
    %v323 = vpack.c.bf16 %v309, %v308
    %v324 = vpack.c.bf16 %v311, %v310
    %v325 = vpack.c.bf16 %v313, %v312
    %v326 = vpack.c.bf16 %v315, %v314
    %v327 = vpack.c.bf16 %v317, %v316
    %v328 = vpack.c.bf16 %v319, %v318
    %v329 = vpack.c.bf16 %v321, %v320
    %v338 = vunpack.c.l.b16 %v322
    %v339 = vunpack.c.h.b16 %v322
    %v340 = vunpack.c.l.b16 %v323
    %v341 = vunpack.c.h.b16 %v323
    %v342 = vunpack.c.l.b16 %v324
    %v343 = vunpack.c.h.b16 %v324
    %v344 = vunpack.c.l.b16 %v325
    %v345 = vunpack.c.h.b16 %v325
    %v346 = vunpack.c.l.b16 %v326
    %v347 = vunpack.c.h.b16 %v326
    %v348 = vunpack.c.l.b16 %v327
    %v349 = vunpack.c.h.b16 %v327
    %v350 = vunpack.c.l.b16 %v328
    %v351 = vunpack.c.h.b16 %v328
    %v352 = vunpack.c.l.b16 %v329
    %v353 = vunpack.c.h.b16 %v329
    %v354 = vpack.c.b16 %v338, %v338
    %v355 = vpack.c.b16 %v339, %v339
    %v356 = vpack.c.b16 %v340, %v340
    %v357 = vpack.c.b16 %v341, %v341
    %v358 = vpack.c.b16 %v342, %v342
    %v359 = vpack.c.b16 %v343, %v343
    %v360 = vpack.c.b16 %v344, %v344
    %v361 = vpack.c.b16 %v345, %v345
    %v362 = vpack.c.b16 %v346, %v346
    %v363 = vpack.c.b16 %v347, %v347
    %v364 = vpack.c.b16 %v348, %v348
    %v365 = vpack.c.b16 %v349, %v349
    %v366 = vpack.c.b16 %v350, %v350
    %v367 = vpack.c.b16 %v351, %v351
    %v368 = vpack.c.b16 %v352, %v352
    %v369 = vpack.c.b16 %v353, %v353
    %vm386 = vcmask 60416
    %387 = vst.msk [vmem:[%s2] sm:$0xf] %vm386, %v354
    %388 = vst.msk [vmem:[%s2 + $0x4] sm:$0xf] %vm386, %v355
    %389 = vst.msk [vmem:[%s2 + $0x8] sm:$0xf] %vm386, %v356
    %390 = vst.msk [vmem:[%s2 + $0xc] sm:$0xf] %vm386, %v357
    %391 = vst.msk [vmem:[%s2 + $0x10] sm:$0xf] %vm386, %v358
    %392 = vst.msk [vmem:[%s2 + $0x14] sm:$0xf] %vm386, %v359
    %393 = vst.msk [vmem:[%s2 + $0x18] sm:$0xf] %vm386, %v360
    %394 = vst.msk [vmem:[%s2 + $0x1c] sm:$0xf] %vm386, %v361
    %395 = vst.msk [vmem:[%s2 + $0x20] sm:$0xf] %vm386, %v362
    %396 = vst.msk [vmem:[%s2 + $0x24] sm:$0xf] %vm386, %v363
    %397 = vst.msk [vmem:[%s2 + $0x28] sm:$0xf] %vm386, %v364
    %398 = vst.msk [vmem:[%s2 + $0x2c] sm:$0xf] %vm386, %v365
    %399 = vst.msk [vmem:[%s2 + $0x30] sm:$0xf] %vm386, %v366
    %400 = vst.msk [vmem:[%s2 + $0x34] sm:$0xf] %vm386, %v367
    %401 = vst.msk [vmem:[%s2 + $0x38] sm:$0xf] %vm386, %v368
    %402 = vst.msk [vmem:[%s2 + $0x3c] sm:$0xf] %vm386, %v369
    %v403 = vsel %vm286, %v306, 0.0
    %v404 = vsel %vm286, %v307, 0.0
    %v405 = vadd.f32 %v403, %v404
    %v406 = vsel %vm286, %v308, 0.0
    %v407 = vadd.f32 %v405, %v406
    %v408 = vsel %vm286, %v309, 0.0
    %v409 = vadd.f32 %v407, %v408
    %v410 = vsel %vm286, %v310, 0.0
    %v411 = vadd.f32 %v409, %v410
    %v412 = vsel %vm286, %v311, 0.0
    %v413 = vadd.f32 %v411, %v412
    %v414 = vsel %vm286, %v312, 0.0
    %v415 = vadd.f32 %v413, %v414
    %v416 = vsel %vm286, %v313, 0.0
    %v417 = vadd.f32 %v415, %v416
    %v418 = vsel %vm286, %v314, 0.0
    %v419 = vadd.f32 %v417, %v418
    %v420 = vsel %vm286, %v315, 0.0
    %v421 = vadd.f32 %v419, %v420
    %v422 = vsel %vm286, %v316, 0.0
    %v423 = vadd.f32 %v421, %v422
    %v424 = vsel %vm286, %v317, 0.0
    %v425 = vadd.f32 %v423, %v424
    %v426 = vsel %vm286, %v318, 0.0
    %v427 = vadd.f32 %v425, %v426
    %v428 = vsel %vm286, %v319, 0.0
    %v429 = vadd.f32 %v427, %v428
    %v430 = vsel %vm286, %v320, 0.0
    %v431 = vadd.f32 %v429, %v430
    %v432 = vsel %vm286, %v321, 0.0
    %v433 = vadd.f32 %v431, %v432
    %v434 = vrot.slane %v433, 4
    %v435 = vadd.f32 %v433, %v434
    %v436 = vrot.slane %v435, 2
    %v437 = vadd.f32 %v435, %v436
    %v438 = vrot.slane %v437, 1
    %v439 = vadd.f32 %v437, %v438
    %vm440 = vcmask 57344
    %441 = vst.msk [vmem:[%s3] sm:$0x1] %vm440, %v439
    %v442 = vmul.f32 %v306, %v306
    %v443 = vmul.f32 %v307, %v307
    %v444 = vmul.f32 %v308, %v308
    %v445 = vmul.f32 %v309, %v309
    %v446 = vmul.f32 %v310, %v310
    %v447 = vmul.f32 %v311, %v311
    %v448 = vmul.f32 %v312, %v312
    %v449 = vmul.f32 %v313, %v313
    %v450 = vmul.f32 %v314, %v314
    %v451 = vmul.f32 %v315, %v315
    %v452 = vmul.f32 %v316, %v316
    %v453 = vmul.f32 %v317, %v317
    %v454 = vmul.f32 %v318, %v318
    %v455 = vmul.f32 %v319, %v319
    %v456 = vmul.f32 %v320, %v320
    %v457 = vmul.f32 %v321, %v321
    %v458 = vsel %vm286, %v442, 0.0
    %v459 = vsel %vm286, %v443, 0.0
    %v460 = vadd.f32 %v458, %v459
    %v461 = vsel %vm286, %v444, 0.0
    %v462 = vadd.f32 %v460, %v461
    %v463 = vsel %vm286, %v445, 0.0
    %v464 = vadd.f32 %v462, %v463
    %v465 = vsel %vm286, %v446, 0.0
    %v466 = vadd.f32 %v464, %v465
    %v467 = vsel %vm286, %v447, 0.0
    %v468 = vadd.f32 %v466, %v467
    %v469 = vsel %vm286, %v448, 0.0
    %v470 = vadd.f32 %v468, %v469
    %v471 = vsel %vm286, %v449, 0.0
    %v472 = vadd.f32 %v470, %v471
    %v473 = vsel %vm286, %v450, 0.0
    %v474 = vadd.f32 %v472, %v473
    %v475 = vsel %vm286, %v451, 0.0
    %v476 = vadd.f32 %v474, %v475
    %v477 = vsel %vm286, %v452, 0.0
    %v478 = vadd.f32 %v476, %v477
    %v479 = vsel %vm286, %v453, 0.0
    %v480 = vadd.f32 %v478, %v479
    %v481 = vsel %vm286, %v454, 0.0
    %v482 = vadd.f32 %v480, %v481
    %v483 = vsel %vm286, %v455, 0.0
    %v484 = vadd.f32 %v482, %v483
    %v485 = vsel %vm286, %v456, 0.0
    %v486 = vadd.f32 %v484, %v485
    %v487 = vsel %vm286, %v457, 0.0
    %v488 = vadd.f32 %v486, %v487
    %v489 = vrot.slane %v488, 4
    %v490 = vadd.f32 %v488, %v489
    %v491 = vrot.slane %v490, 2
    %v492 = vadd.f32 %v490, %v491
    %v493 = vrot.slane %v492, 1
    %v494 = vadd.f32 %v492, %v493
    %495 = vst.msk [vmem:[%s4] sm:$0x1] %vm440, %v494
  $region17: #{resblk_forward.7} parent=0 // pred_fallthru
    _
  // Predicated region
  $region18: #{resblk_forward.7} parent=0 // pred_check
    _
  $region19: #{resblk_forward.7} parent=0 // pred_check_branch
    %497 = sbr.rel (0) target = $region21
  $region20: #{resblk_forward.7} parent=0 // pred_region
    _
  $region21: #{resblk_forward.7} parent=0 // pred_fallthru
    _
  // Predicated region
  $region22: #{resblk_forward.7} parent=0 // pred_check
    _
  $region23: #{resblk_forward.7} parent=0 // pred_check_branch
    %499 = sbr.rel (0) target = $region25
  $region24: #{resblk_forward.7} parent=0 // pred_region
    _
  $region25: #{resblk_forward.7} parent=0 // pred_fallthru
    _
  // Predicated region
  $region26: #{resblk_forward.7} parent=0 // pred_check
    _
  $region27: #{resblk_forward.7} parent=0 // pred_check_branch
    %501 = sbr.rel (0) target = $region29
  $region28: #{resblk_forward.7} parent=0 // pred_region
    _
  $region29: #{resblk_forward.7} parent=0 // pred_fallthru
    _
  // Predicated region
  $region30: #{resblk_forward.7} parent=0 // pred_check
    _
  $region31: #{resblk_forward.7} parent=0 // pred_check_branch
    %503 = sbr.rel (0) target = $region33
  $region32: #{resblk_forward.7} parent=0 // pred_region
    _
  $region33: #{resblk_forward.7} parent=0 // pred_fallthru
    _
  // Predicated region
  $region34: #{resblk_forward.7} parent=0 // pred_check
    _
  $region35: #{resblk_forward.7} parent=0 // pred_check_branch
    %505 = sbr.rel (0) target = $region37
  $region36: #{resblk_forward.7} parent=0 // pred_region
    _
  $region37: #{resblk_forward.7} parent=0 // pred_fallthru
    _
  // Predicated region
  $region38: #{resblk_forward.7} parent=0 // pred_check
    _
  $region39: #{resblk_forward.7} parent=0 // pred_check_branch
    %507 = sbr.rel (0) target = $region41
  $region40: #{resblk_forward.7} parent=0 // pred_region
    _
  $region41: #{resblk_forward.7} parent=0 // pred_fallthru
    _

</llo_original>
